<compile_context>
chip_gen: v7x
topology: tpu7x:2x2x1
jax: 0.10.0
libtpu: 0.0.40
codegen_flags: <defaults>
</compile_context>

<pallas_src>
import numpy as np
import jax
import jax.numpy as jnp
from jax.experimental import pallas as pl
from jax.experimental.pallas import tpu as pltpu

C = 64          # Conv3d(64, 64, ...) fixes the channel count
T = 3           # Increasing_Dimension groups the batch by 3 temporal frames
K = T * C       # joint (time, channel) sublane axis = 192
N_LAYERS = 3
BN_EPS = 1e-5


# ------------------------------ Pallas kernel -------------------------------

def strm_fused_kernel(x_ref, w_ref, s_ref, o_ref):
    """One (192, hw) tile: 3x (conv+BN) + residual + STRF + ReLU, fully fused.

    x_ref/o_ref: (192, hw) f32.  Rows of x = joint index t*64+c (t-major), a
    free view of the NCHW input; rows of o = final (B*3, 64, H, W) order, so
    the output needs no host-side transpose either.
    w_ref: (4, 192, 192) bf16  [W1+I, W2, W3 (output-permuted), P (final STRF)].
    s_ref: (3, 192, 1) f32 per-layer shifts (conv bias + BN folded; layer 3
    already permuted to output order).
    """
    x = x_ref[...]                         # f32; residual for every layer
    xb = x.astype(jnp.bfloat16)

    # layer 1: residual folded into the weight (identity added on host)
    h = jnp.dot(w_ref[0], xb, preferred_element_type=jnp.float32)
    h = jnp.maximum(h + s_ref[0], 0.0)

    # layer 2: residual added exactly in f32
    h = jnp.dot(w_ref[1], h.astype(jnp.bfloat16),
                preferred_element_type=jnp.float32)
    h = jnp.maximum(h + s_ref[1] + x, 0.0)

    # layer 3: emitted directly in the final output row order; the residual is
    # brought into that order with one bf16 permutation matmul (P @ x).
    xp = jnp.dot(w_ref[3], xb, preferred_element_type=jnp.float32)
    y = jnp.dot(w_ref[2], h.astype(jnp.bfloat16),
                preferred_element_type=jnp.float32)
    y = jnp.maximum(y + s_ref[2] + xp, 0.0)

    o_ref[...] = y.astype(o_ref.dtype)


def strm_fused(xv, w_all, shift_all, *, hw_tile):
    B, k, hw = xv.shape
    assert k == K
    grid = (B, pl.cdiv(hw, hw_tile))
    # 2x double-buffered in/out tiles + f32/bf16 temporaries + ~0.6 MiB weights
    est_vmem = 16 * K * hw_tile * 4 + (3 << 20)
    return pl.pallas_call(
        strm_fused_kernel,
        out_shape=jax.ShapeDtypeStruct((B, K, hw), xv.dtype),
        grid_spec=pltpu.PrefetchScalarGridSpec(
            num_scalar_prefetch=0,
            grid=grid,
            in_specs=[
                pl.BlockSpec((None, K, hw_tile), lambda b, s: (b, 0, s)),   # x
                pl.BlockSpec((N_LAYERS + 1, K, K), lambda b, s: (0, 0, 0)),  # W
                pl.BlockSpec((N_LAYERS, K, 1), lambda b, s: (0, 0, 0)),      # shift
            ],
            out_specs=pl.BlockSpec((None, K, hw_tile), lambda b, s: (b, 0, s)),
        ),
        compiler_params=pltpu.CompilerParams(
            dimension_semantics=("parallel", "parallel"),
            vmem_limit_bytes=int(min(64 << 20, max(32 << 20, est_vmem)))),
    )(xv, w_all, shift_all)


# ------------------------------ host-side fold -------------------------------

def fold_params(raw_params):
    """Fold conv bias + eval-mode BN + circulant temporal stacking + the STRF
    shuffles into bf16 (out,in) weights, a residual-permutation matrix P and
    f32 per-layer shift columns."""
    k_idx = np.arange(K)
    # previous layer's STRF expressed on this layer's input side
    strf_in = (k_idx % T) * C + (k_idx // T)
    # final STRF + Reducing_Dimension: output row r=t*64+c reads t-major c*3+t
    out_perm = (k_idx % C) * T + (k_idx // C)
    ws, shifts = [], []
    for li, (wt, bias, gamma, beta, mean, var) in enumerate(raw_params):
        wt = np.asarray(wt, np.float32)                       # (co, ci, kt)
        bias = np.asarray(bias, np.float32)
        gamma = np.asarray(gamma, np.float32)
        beta = np.asarray(beta, np.float32)
        mean = np.asarray(mean, np.float32)
        var = np.asarray(var, np.float32)
        eff_scale = gamma / np.sqrt(var + BN_EPS)
        eff_shift = (bias - mean) * eff_scale + beta
        # repeat(1,1,3,1,1)[:, :, 2:7] + Conv3d kernel (3,1,1) => output frame t
        # reads original frame (t+kt+2)%3, i.e. a circulant stack:
        #   big[s*64+ci, t*64+co] = wt[co, ci, (s - t - 2) % 3]
        big = np.zeros((K, K), np.float32)
        for t in range(T):
            for s in range(T):
                kt = (s - t - 2) % T
                big[s * C:(s + 1) * C, t * C:(t + 1) * C] = wt[:, :, kt].T
        big = big * np.tile(eff_scale, T)[None, :]   # BN scale on output columns
        if li > 0:
            big = big[strf_in, :]                    # fold previous layer's STRF
        w_t = np.ascontiguousarray(big.T)            # (out, in): column-vector form
        shift = np.tile(eff_shift, T)                # (192,) by output joint index
        if li == 0:
            w_t = w_t + np.eye(K, dtype=np.float32)  # fold the layer-1 residual
        if li == N_LAYERS - 1:
            w_t = w_t[out_perm, :]                   # emit final output order
            shift = shift[out_perm]
        ws.append(w_t)
        shifts.append(shift)
    # permutation matrix for the layer-3 residual: (P @ x)[r] = x[out_perm[r]]
    P = np.zeros((K, K), np.float32)
    P[np.arange(K), out_perm] = 1.0
    ws.append(P)
    w_all = jnp.asarray(np.stack(ws), dtype=jnp.bfloat16)          # (4, 192, 192)
    shift_all = jnp.asarray(np.stack(shifts)[:, :, None], jnp.float32)  # (3,192,1)
    return w_all, shift_all


# ------------------------------ wrapper glue ---------------------------------

def _round_up(x, m):
    return (x + m - 1) // m * m


def _pick_hw_tile(hw, nb):
    # Lane-dense tiles (multiple of 128), capped so the per-step VMEM footprint
    # (incl. compiler temporaries) stays ~16 MiB (safe on v7x's 64 MiB), while
    # guaranteeing >= 4 total grid steps (>= 2 per v7x TensorCore) when possible.
    LANE, CAP = 128, 2048
    if hw <= LANE:
        return hw                                     # full axis: always legal
    tiles_wanted = max(1, -(-4 // nb))                # ceil(4 / num_batches)
    t = min(CAP, _round_up(-(-hw // tiles_wanted), LANE))
    return hw if t >= hw else t


@jax.jit
def _strm_apply(x, w_all, shift_all):
    B3, c, H, W = x.shape
    B = B3 // T
    hw = H * W
    # FREE views (no HBM traffic): (B*3,64,H,W) <-> (B, 192, H*W); the t-major
    # joint (time, channel) index is the sublane axis, H*W the lane axis.
    xv = x.reshape(B, K, hw)
    yv = strm_fused(xv, w_all, shift_all, hw_tile=_pick_hw_tile(hw, B))
    return yv.reshape(B3, c, H, W)


def strm_forward(x, raw_params):
    """x: (B*3, 64, H, W) NCHW, like the PyTorch module."""
    B3, c, H, W = x.shape
    assert c == C and B3 % T == 0
    w_all, shift_all = fold_params(raw_params)
    return _strm_apply(x, w_all, shift_all)


# ----------------------- matched (structural) reference ----------------------

def folded_ref(x, w_all, shift_all):
    """Plain-JAX replica of the fused kernel math (bf16 MXU, f32 epilogue) for a
    tight structural check of the layout / folding / permutation handling."""
    B3, c, H, W = x.shape
    B = B3 // T
    xv = x.reshape(B, K, H * W).astype(jnp.float32)
    xb = xv.astype(jnp.bfloat16)

    def mm(w, a):
        return jnp.einsum('ok,bkn->bon', w, a,
                          preferred_element_type=jnp.float32)

    h = jnp.maximum(mm(w_all[0], xb) + shift_all[0], 0.0)
    h = jnp.maximum(mm(w_all[1], h.astype(jnp.bfloat16)) + shift_all[1] + xv, 0.0)
    xp = mm(w_all[3], xb)
    y = jnp.maximum(mm(w_all[2], h.astype(jnp.bfloat16)) + shift_all[2] + xp, 0.0)
    return y.reshape(B3, c, H, W)


# ---------------------------- pure-JAX f32 reference --------------------------

def ref_forward(x, raw_params):
    B3, c, H, W = x.shape
    B = B3 // 3
    in0 = x.reshape(B, T, c, H, W).transpose(0, 2, 1, 3, 4)   # (B, C, 3, H, W)
    cur = in0
    for (wt, bias, gamma, beta, mean, var) in raw_params:
        rep = jnp.concatenate([cur, cur, cur], axis=2)        # repeat(1,1,3,1,1)
        sl = rep[:, :, 2:7]                                   # (B, C, 5, H, W)
        outs = []
        for to in range(T):
            win = sl[:, :, to:to + 3]                         # (B, C, 3, H, W)
            outs.append(jnp.einsum('bcthw,oct->bohw', win, wt,
                                   precision='highest'))
        conv = jnp.stack(outs, axis=2) + bias[None, :, None, None, None]
        bn = ((conv - mean[None, :, None, None, None])
              / jnp.sqrt(var[None, :, None, None, None] + BN_EPS)
              * gamma[None, :, None, None, None]
              + beta[None, :, None, None, None])
        y = bn + in0
        # STRF
        yv = y.reshape(B, c * T, H, W).reshape(B, 64, (c * T) // 64, H, W)
        yv = jnp.swapaxes(yv, 1, 2).reshape(B, c, T, H, W)
        cur = jnp.maximum(yv, 0.0)
    return jnp.swapaxes(cur, 1, 2).reshape(B * 3, c, H, W)    # Reducing_Dimension


# ------------------------------- parameters ----------------------------------

def init_params(key):
    params = []
    for i in range(3):
        k = jax.random.fold_in(key, i)
        kw, kb, kg, kbt, km, kv = jax.random.split(k, 6)
        wt    = jax.random.normal(kw, (C, C, T), jnp.float32) * 0.05  # (co, ci, kt)
        bias  = jax.random.normal(kb, (C,), jnp.float32) * 0.1
        gamma = 1.0 + 0.1 * jax.random.normal(kg, (C,), jnp.float32)
        beta  = 0.1 * jax.random.normal(kbt, (C,), jnp.float32)
        mean  = 0.1 * jax.random.normal(km, (C,), jnp.float32)
        var   = 1.0 + 0.1 * jax.random.uniform(kv, (C,), jnp.float32)
        params.append((wt, bias, gamma, beta, mean, var))
    return params


if __name__ == "__main__":
    key = jax.random.PRNGKey(0)
    kx, kp = jax.random.split(key)
    Bg, H, W = 2, 16, 16                          # input batch = Bg*3 = 6
    x = jax.random.normal(kx, (Bg * T, C, H, W), jnp.float32)
    raw_params = init_params(kp)

    out = strm_forward(x, raw_params)
    out = jax.block_until_ready(out)
    assert out.shape == (Bg * T, C, H, W)

    # Tight structural check vs a plain-JAX replica of the fused bf16 math.
    w_all, shift_all = fold_params(raw_params)
    ref_struct = jax.block_until_ready(folded_ref(x, w_all, shift_all))
    np.testing.assert_allclose(np.asarray(out), np.asarray(ref_struct),
                               rtol=5e-3, atol=5e-3)

    # End-to-end check vs the f32 module-semantics reference.  Tolerance sized
    # for the intentional bf16 MXU operands (3-layer 192-term contractions).
    ref = jax.block_until_ready(ref_forward(x, raw_params))
    np.testing.assert_allclose(np.asarray(out), np.asarray(ref),
                               rtol=3e-2, atol=3e-2)
    print("KERNEL_OK")
</pallas_src>

<mosaic_0001>
module attributes {stable_mosaic.version = 11 : i64} {
  func.func @strm_fused_kernel(%arg0: i32, %arg1: i32, %arg2: memref<1x192x128xf32, #tpu.memory_space<vmem>>, %arg3: memref<4x192x192xbf16, #tpu.memory_space<vmem>>, %arg4: memref<3x192x1xf32, #tpu.memory_space<vmem>>, %arg5: memref<1x192x128xf32, #tpu.memory_space<vmem>>) attributes {dimension_semantics = [#tpu.dimension_semantics<parallel>, #tpu.dimension_semantics<parallel>], iteration_bounds = array<i64: 2, 2>, scalar_prefetch = 0 : i64, scratch_operands = 0 : i64, tpu.core_type = #tpu.core_type<tc>, window_params = [{transform_indices = @transform_0, window_bounds = array<i64: 1, 192, 128>}, {pipeline_mode = #tpu.pipeline_mode<synchronous>, transform_indices = @transform_1, window_bounds = array<i64: 4, 192, 192>}, {pipeline_mode = #tpu.pipeline_mode<synchronous>, transform_indices = @transform_2, window_bounds = array<i64: 3, 192, 1>}, {transform_indices = @transform_3, window_bounds = array<i64: 1, 192, 128>}]} {
    %c0 = arith.constant 0 : index
    %c0_0 = arith.constant 0 : index
    %c0_1 = arith.constant 0 : index
    %0 = vector.load %arg2[%c0, %c0_0, %c0_1] : memref<1x192x128xf32, #tpu.memory_space<vmem>>, vector<1x192x128xf32>
    %1 = vector.shape_cast %0 : vector<1x192x128xf32> to vector<192x128xf32>
    %2 = arith.truncf %1 : vector<192x128xf32> to vector<192x128xbf16>
    %c0_2 = arith.constant 0 : index
    %c0_3 = arith.constant 0 : index
    %c0_4 = arith.constant 0 : index
    %3 = vector.load %arg3[%c0_2, %c0_3, %c0_4] : memref<4x192x192xbf16, #tpu.memory_space<vmem>>, vector<1x192x192xbf16>
    %4 = vector.shape_cast %3 : vector<1x192x192xbf16> to vector<192x192xbf16>
    %cst = arith.constant dense<0.000000e+00> : vector<192x128xf32>
    %5 = tpu.matmul %4, %2, %cst {dimension_numbers = #tpu.dot_dimension_numbers<[1], [0], [0], [1], [0, 0, 1, 1], [], []>} : vector<192x192xbf16>, vector<192x128xbf16>, vector<192x128xf32> -> vector<192x128xf32>
    %c0_5 = arith.constant 0 : index
    %c0_6 = arith.constant 0 : index
    %c0_7 = arith.constant 0 : index
    %6 = vector.load %arg4[%c0_5, %c0_6, %c0_7] : memref<3x192x1xf32, #tpu.memory_space<vmem>>, vector<1x192x1xf32>
    %7 = vector.shape_cast %6 : vector<1x192x1xf32> to vector<192x1xf32>
    %8 = vector.broadcast %7 : vector<192x1xf32> to vector<192x128xf32>
    %9 = arith.addf %5, %8 : vector<192x128xf32>
    %cst_8 = arith.constant 0.000000e+00 : f32
    %10 = vector.broadcast %cst_8 : f32 to vector<192x128xf32>
    %11 = arith.maximumf %9, %10 : vector<192x128xf32>
    %c1 = arith.constant 1 : index
    %c0_9 = arith.constant 0 : index
    %c0_10 = arith.constant 0 : index
    %12 = vector.load %arg3[%c1, %c0_9, %c0_10] : memref<4x192x192xbf16, #tpu.memory_space<vmem>>, vector<1x192x192xbf16>
    %13 = vector.shape_cast %12 : vector<1x192x192xbf16> to vector<192x192xbf16>
    %14 = arith.truncf %11 : vector<192x128xf32> to vector<192x128xbf16>
    %cst_11 = arith.constant dense<0.000000e+00> : vector<192x128xf32>
    %15 = tpu.matmul %13, %14, %cst_11 {dimension_numbers = #tpu.dot_dimension_numbers<[1], [0], [0], [1], [0, 0, 1, 1], [], []>} : vector<192x192xbf16>, vector<192x128xbf16>, vector<192x128xf32> -> vector<192x128xf32>
    %c1_12 = arith.constant 1 : index
    %c0_13 = arith.constant 0 : index
    %c0_14 = arith.constant 0 : index
    %16 = vector.load %arg4[%c1_12, %c0_13, %c0_14] : memref<3x192x1xf32, #tpu.memory_space<vmem>>, vector<1x192x1xf32>
    %17 = vector.shape_cast %16 : vector<1x192x1xf32> to vector<192x1xf32>
    %18 = vector.broadcast %17 : vector<192x1xf32> to vector<192x128xf32>
    %19 = arith.addf %15, %18 : vector<192x128xf32>
    %20 = arith.addf %19, %1 : vector<192x128xf32>
    %cst_15 = arith.constant 0.000000e+00 : f32
    %21 = vector.broadcast %cst_15 : f32 to vector<192x128xf32>
    %22 = arith.maximumf %20, %21 : vector<192x128xf32>
    %c3 = arith.constant 3 : index
    %c0_16 = arith.constant 0 : index
    %c0_17 = arith.constant 0 : index
    %23 = vector.load %arg3[%c3, %c0_16, %c0_17] : memref<4x192x192xbf16, #tpu.memory_space<vmem>>, vector<1x192x192xbf16>
    %24 = vector.shape_cast %23 : vector<1x192x192xbf16> to vector<192x192xbf16>
    %cst_18 = arith.constant dense<0.000000e+00> : vector<192x128xf32>
    %25 = tpu.matmul %24, %2, %cst_18 {dimension_numbers = #tpu.dot_dimension_numbers<[1], [0], [0], [1], [0, 0, 1, 1], [], []>} : vector<192x192xbf16>, vector<192x128xbf16>, vector<192x128xf32> -> vector<192x128xf32>
    %c2 = arith.constant 2 : index
    %c0_19 = arith.constant 0 : index
    %c0_20 = arith.constant 0 : index
    %26 = vector.load %arg3[%c2, %c0_19, %c0_20] : memref<4x192x192xbf16, #tpu.memory_space<vmem>>, vector<1x192x192xbf16>
    %27 = vector.shape_cast %26 : vector<1x192x192xbf16> to vector<192x192xbf16>
    %28 = arith.truncf %22 : vector<192x128xf32> to vector<192x128xbf16>
    %cst_21 = arith.constant dense<0.000000e+00> : vector<192x128xf32>
    %29 = tpu.matmul %27, %28, %cst_21 {dimension_numbers = #tpu.dot_dimension_numbers<[1], [0], [0], [1], [0, 0, 1, 1], [], []>} : vector<192x192xbf16>, vector<192x128xbf16>, vector<192x128xf32> -> vector<192x128xf32>
    %c2_22 = arith.constant 2 : index
    %c0_23 = arith.constant 0 : index
    %c0_24 = arith.constant 0 : index
    %30 = vector.load %arg4[%c2_22, %c0_23, %c0_24] : memref<3x192x1xf32, #tpu.memory_space<vmem>>, vector<1x192x1xf32>
    %31 = vector.shape_cast %30 : vector<1x192x1xf32> to vector<192x1xf32>
    %32 = vector.broadcast %31 : vector<192x1xf32> to vector<192x128xf32>
    %33 = arith.addf %29, %32 : vector<192x128xf32>
    %34 = arith.addf %33, %25 : vector<192x128xf32>
    %cst_25 = arith.constant 0.000000e+00 : f32
    %35 = vector.broadcast %cst_25 : f32 to vector<192x128xf32>
    %36 = arith.maximumf %34, %35 : vector<192x128xf32>
    %c0_26 = arith.constant 0 : index
    %c0_27 = arith.constant 0 : index
    %c0_28 = arith.constant 0 : index
    %37 = vector.load %arg5[%c0_26, %c0_27, %c0_28] : memref<1x192x128xf32, #tpu.memory_space<vmem>>, vector<1x192x128xf32>
    %38 = vector.shape_cast %37 : vector<1x192x128xf32> to vector<192x128xf32>
    %39 = vector.shape_cast %36 : vector<192x128xf32> to vector<1x192x128xf32>
    tpu.vector_store %arg5[%c0_26, %c0_27, %c0_28], %39 {strides = array<i32>} : memref<1x192x128xf32, #tpu.memory_space<vmem>>, vector<1x192x128xf32>,
    return
  }
  func.func @transform_0(%arg0: i32, %arg1: i32) -> (i32, i32, i32) {
    %c0_i32 = arith.constant 0 : i32
    %c0_i32_0 = arith.constant 0 : i32
    return %arg0, %c0_i32, %arg1 : i32, i32, i32
  }
  func.func @transform_1(%arg0: i32, %arg1: i32) -> (i32, i32, i32) {
    %c0_i32 = arith.constant 0 : i32
    %c0_i32_0 = arith.constant 0 : i32
    %c0_i32_1 = arith.constant 0 : i32
    %c0_i32_2 = arith.constant 0 : i32
    return %c0_i32, %c0_i32_0, %c0_i32_1 : i32, i32, i32
  }
  func.func @transform_2(%arg0: i32, %arg1: i32) -> (i32, i32, i32) {
    %c0_i32 = arith.constant 0 : i32
    %c0_i32_0 = arith.constant 0 : i32
    %c0_i32_1 = arith.constant 0 : i32
    %c0_i32_2 = arith.constant 0 : i32
    return %c0_i32, %c0_i32_0, %c0_i32_1 : i32, i32, i32
  }
  func.func @transform_3(%arg0: i32, %arg1: i32) -> (i32, i32, i32) {
    %c0_i32 = arith.constant 0 : i32
    %c0_i32_0 = arith.constant 0 : i32
    return %arg0, %c0_i32, %arg1 : i32, i32, i32
  }
}

</mosaic_0001>

<llo_original>
// kernel: _strm_apply.1
$region0: #{_strm_apply.1}
  #allocation0 [shape = 'u32[]', space=smem, size = 0x4, offset = 0x4, fixed_abs, tag = 'smem constant byte address 0x4 - core index']
  #allocation1 [shape = 'u32[144,128]{1,0:T(1,128)}', space=vmem, size = 0x12000, scoped, tag = 'internal scratch']
  %s0 = inlined_call_operand.vmem [shape: f32[2,192,256], index: 0, kind: input, shape index: {}]
  %s1 = inlined_call_operand.vmem [shape: bf16[4,192,192], index: 1, kind: input, shape index: {}]
  %s2 = inlined_call_operand.vmem [shape: f32[3,192,1], index: 2, kind: input, shape index: {}]
  %s3 = inlined_call_operand.vmem [shape: f32[2,192,256], index: 3, kind: output, shape index: {}]
  %s4 = sld [smem:[#allocation0]]
  $region117: #{_strm_apply.1} parent=0
    _
  %s6 = ssub.s32 1, %s4
  %s7 = scalar_select 0, %s6, %s4
  $region1: #{_strm_apply.1} parent=0
    #allocation2 [shape = 'u8[196608]{0}', space=vmem, size = 0x30000, scoped, tag = 'input window, operand 0']
    #allocation3 [shape = 'u8[196608]{0}', space=vmem, size = 0x30000, scoped, tag = 'output window, operand 0']
    loop: start=0, step=1, limit=6
    $region2: #{_strm_apply.1} parent=1 // loop_pre_header
      _
    $region3: #{_strm_apply.1} parent=1 // loop_header
      %s9 = sphi 0, %s13
      %p10 = scmp.ge.s32.totalorder %s9, 6
      %s16 = sphi 0, %s28
      %s17 = sphi 0, %s24
      %s18 = sphi 0, %s16
      %s19 = sphi 0, %s17
      %s20 = sphi 0, %s18
      %s21 = sphi 0, %s19
      %s33 = sphi 0, %s35
      %s36 = sphi 0, %s33
      %s37 = sphi 0, %s36
      %s53 = sphi 0, %s37
      %s57 = sphi 0, %s57
      %s59 = sphi 0, %s57
      %s60 = sphi 0, %s59
      %s74 = sphi 0, %s60
      %s78 = sphi 0, %s78
      %s80 = sphi 0, %s78
      %s81 = sphi 0, %s80
      %s95 = sphi 0, %s81
      %s103 = sphi 0, %s105
      %s106 = sphi 0, %s103
      %s107 = sphi 0, %s106
      %s123 = sphi 0, %s107
    $region4: #{_strm_apply.1} parent=1 // loop_header_branch
      %12 = sbr.rel (%p10) target = $region8
    $region5: #{_strm_apply.1} parent=1 // loop_body
      %s14 = ssub.s32 %s9, 1
      %s15 = ssub.s32 %s9, 2
      %s22 = sadd.s32 1, %s17
      %p23 = scmp.ge.s32.totalorder %s22, 2
      %s24 = scalar_select %p23, 0, %s22
      %s25 = sadd.s32 1, %s16
      %s26 = scalar_select %p23, %s25, %s16
      %p27 = scmp.ge.s32.totalorder %s26, 2
      %s28 = scalar_select %p27, 0, %s26
      %s29 = ssub.s32 %s16, %s28
      %s30 = ssub.s32 %s17, %s24
      %s31 = sor.u32 %s29, %s30
      %p32 = scmp.eq.s32.totalorder %s31, 0
      %s34 = sadd.s32 %s33, 1
      %s35 = scalar_select %p32, %s33, %s34
      %p38 = pneg %p32
      %p39 = scmp.eq.s32.totalorder %s9, 3
      %p40 = por %p38, %p39
      %p41 = scmp.ne.s32.totalorder %s33, %s36
      %p42 = scmp.eq.s32.totalorder %s9, 0
      %p43 = por %p41, %p42
      %p44 = scmp.ne.s32.totalorder %s33, %s36
      %p45 = scmp.eq.s32.totalorder %s14, 3
      %p46 = por %p44, %p45
      %p47 = scmp.ne.s32.totalorder %s36, %s37
      %p48 = scmp.eq.s32.totalorder %s14, 0
      %p49 = por %p47, %p48
      %p50 = scmp.ne.s32.totalorder %s36, %s37
      %p51 = scmp.eq.s32.totalorder %s15, 3
      %p52 = por %p50, %p51
      %p54 = scmp.ne.s32.totalorder %s37, %s53
      %p55 = scmp.eq.s32.totalorder %s15, 0
      %p56 = por %p54, %p55
      %s58 = sadd.s32 %s57, 1
      %p61 = scmp.eq.s32.totalorder %s9, 3
      %p62 = scmp.ne.s32.totalorder %s57, %s59
      %p63 = scmp.eq.s32.totalorder %s9, 0
      %p64 = por %p62, %p63
      %p65 = scmp.ne.s32.totalorder %s57, %s59
      %p66 = scmp.eq.s32.totalorder %s14, 3
      %p67 = por %p65, %p66
      %p68 = scmp.ne.s32.totalorder %s59, %s60
      %p69 = scmp.eq.s32.totalorder %s14, 0
      %p70 = por %p68, %p69
      %p71 = scmp.ne.s32.totalorder %s59, %s60
      %p72 = scmp.eq.s32.totalorder %s15, 3
      %p73 = por %p71, %p72
      %p75 = scmp.ne.s32.totalorder %s60, %s74
      %p76 = scmp.eq.s32.totalorder %s15, 0
      %p77 = por %p75, %p76
      %s79 = sadd.s32 %s78, 1
      %p82 = scmp.eq.s32.totalorder %s9, 3
      %p83 = scmp.ne.s32.totalorder %s78, %s80
      %p84 = scmp.eq.s32.totalorder %s9, 0
      %p85 = por %p83, %p84
      %p86 = scmp.ne.s32.totalorder %s78, %s80
      %p87 = scmp.eq.s32.totalorder %s14, 3
      %p88 = por %p86, %p87
      %p89 = scmp.ne.s32.totalorder %s80, %s81
      %p90 = scmp.eq.s32.totalorder %s14, 0
      %p91 = por %p89, %p90
      %p92 = scmp.ne.s32.totalorder %s80, %s81
      %p93 = scmp.eq.s32.totalorder %s15, 3
      %p94 = por %p92, %p93
      %p96 = scmp.ne.s32.totalorder %s81, %s95
      %p97 = scmp.eq.s32.totalorder %s15, 0
      %p98 = por %p96, %p97
      %s99 = ssub.s32 %s16, %s28
      %s100 = ssub.s32 %s17, %s24
      %s101 = sor.u32 %s99, %s100
      %p102 = scmp.eq.s32.totalorder %s101, 0
      %s104 = sadd.s32 %s103, 1
      %s105 = scalar_select %p102, %s103, %s104
      %p108 = pneg %p102
      %p109 = scmp.eq.s32.totalorder %s9, 3
      %p110 = por %p108, %p109
      %p111 = scmp.ne.s32.totalorder %s103, %s106
      %p112 = scmp.eq.s32.totalorder %s9, 0
      %p113 = por %p111, %p112
      %p114 = scmp.ne.s32.totalorder %s103, %s106
      %p115 = scmp.eq.s32.totalorder %s14, 3
      %p116 = por %p114, %p115
      %p117 = scmp.ne.s32.totalorder %s106, %s107
      %p118 = scmp.eq.s32.totalorder %s14, 0
      %p119 = por %p117, %p118
      %p120 = scmp.ne.s32.totalorder %s106, %s107
      %p121 = scmp.eq.s32.totalorder %s15, 3
      %p122 = por %p120, %p121
      %p124 = scmp.ne.s32.totalorder %s107, %s123
      %p125 = scmp.eq.s32.totalorder %s15, 0
      %p126 = por %p124, %p125
      %p127 = scmp.le.s32.totalorder 1, %s9
      %p128 = scmp.lt.s32.totalorder %s9, 5
      %p129 = pnand %p127, %p128
      %p130 = pneg %p129
      // Predicated region
      $region9: #{_strm_apply.1} parent=5 // pred_check
        _
      $region10: #{_strm_apply.1} parent=5 // pred_check_branch
        %132 = sbr.rel (%p129) target = $region12
      $region11: #{_strm_apply.1} parent=5 // pred_region
        %s133 = ssub.s32 %s9, 1
        // Predicated region
        $region13: #{_strm_apply.1} parent=11 // pred_check
          %p134 = pneg %p70
        $region14: #{_strm_apply.1} parent=11 // pred_check_branch
          %136 = sbr.rel (%p134) target = $region16
        $region15: #{_strm_apply.1} parent=11 // pred_region
          _
        $region16: #{_strm_apply.1} parent=11 // pred_fallthru
          _
        // Predicated region
        $region17: #{_strm_apply.1} parent=11 // pred_check
          %p137 = pneg %p91
        $region18: #{_strm_apply.1} parent=11 // pred_check_branch
          %139 = sbr.rel (%p137) target = $region20
        $region19: #{_strm_apply.1} parent=11 // pred_region
          _
        $region20: #{_strm_apply.1} parent=11 // pred_fallthru
          _
      $region12: #{_strm_apply.1} parent=5 // pred_fallthru
        _
      %p140 = scmp.lt.s32.totalorder %s9, 4
      // Predicated region
      $region21: #{_strm_apply.1} parent=5 // pred_check
        %p141 = pneg %p140
      $region22: #{_strm_apply.1} parent=5 // pred_check_branch
        %143 = sbr.rel (%p141) target = $region24
      $region23: #{_strm_apply.1} parent=5 // pred_region
        // Predicated region
        $region25: #{_strm_apply.1} parent=23 // pred_check
          %p144 = pneg %p43
        $region26: #{_strm_apply.1} parent=23 // pred_check_branch
          %146 = sbr.rel (%p144) target = $region28
        $region27: #{_strm_apply.1} parent=23 // pred_region
          %s147 = sand.u32 %s33, 1
          %s148 = sand.u32 %s33, 1
          %s149 = smul.addr %s148, 192
          %s150 = scalar_lea.vmem [#allocation2], %s149
          %s151 = smul.addr %s16, 48
          %s152 = sadd.s32 %s17, %s151
          %s153 = smul.addr %s152, 8
          %s154 = scalar_lea.vmem %s0, %s153
          // Predicated region
          $region29: #{_strm_apply.1} parent=27 // pred_check
            _
          $region30: #{_strm_apply.1} parent=27 // pred_check_branch
            %156 = sbr.rel (0) target = $region32
          $region31: #{_strm_apply.1} parent=27 // pred_region
            // Predicated region
            $region33: #{_strm_apply.1} parent=31 // pred_check
              _
            $region34: #{_strm_apply.1} parent=31 // pred_check_branch
              %158 = sbr.rel (0) target = $region36
            $region35: #{_strm_apply.1} parent=31 // pred_region
              // Predicated region
              $region48: #{_strm_apply.1} parent=35 // pred_check
                _
              $region49: #{_strm_apply.1} parent=35 // pred_check_branch
                %219 = sbr.rel (0) target = $region51
              $region50: #{_strm_apply.1} parent=35 // pred_region
                loop: start=0, step=1, limit=1
                $region52: #{_strm_apply.1} parent=50 // loop_pre_header
                  _
                $region53: #{_strm_apply.1} parent=50 // loop_header
                  %s221 = sphi 0, %s225
                  %p222 = scmp.ge.s32.totalorder %s221, 1
                  %s226 = sphi %s154, %s154
                  %s227 = sphi %s150, %s150
                $region54: #{_strm_apply.1} parent=50 // loop_header_branch
                  %224 = sbr.rel (%p222) target = $region58
                $region55: #{_strm_apply.1} parent=50 // loop_body
                  %v228 = vld [vmem:[%s226] sm:$0xff]
                  %229 = vst [vmem:[%s227] sm:$0xff] %v228
                  %v230 = vld [vmem:[%s226 + $0x10] sm:$0xff]
                  %231 = vst [vmem:[%s227 + $0x8] sm:$0xff] %v230
                  %v232 = vld [vmem:[%s226 + $0x20] sm:$0xff]
                  %233 = vst [vmem:[%s227 + $0x10] sm:$0xff] %v232
                  %v234 = vld [vmem:[%s226 + $0x30] sm:$0xff]
                  %235 = vst [vmem:[%s227 + $0x18] sm:$0xff] %v234
                  %v236 = vld [vmem:[%s226 + $0x40] sm:$0xff]
                  %237 = vst [vmem:[%s227 + $0x20] sm:$0xff] %v236
                  %v238 = vld [vmem:[%s226 + $0x50] sm:$0xff]
                  %239 = vst [vmem:[%s227 + $0x28] sm:$0xff] %v238
                  %v240 = vld [vmem:[%s226 + $0x60] sm:$0xff]
                  %241 = vst [vmem:[%s227 + $0x30] sm:$0xff] %v240
                  %v242 = vld [vmem:[%s226 + $0x70] sm:$0xff]
                  %243 = vst [vmem:[%s227 + $0x38] sm:$0xff] %v242
                  %v244 = vld [vmem:[%s226 + $0x80] sm:$0xff]
                  %245 = vst [vmem:[%s227 + $0x40] sm:$0xff] %v244
                  %v246 = vld [vmem:[%s226 + $0x90] sm:$0xff]
                  %247 = vst [vmem:[%s227 + $0x48] sm:$0xff] %v246
                  %v248 = vld [vmem:[%s226 + $0xa0] sm:$0xff]
                  %249 = vst [vmem:[%s227 + $0x50] sm:$0xff] %v248
                  %v250 = vld [vmem:[%s226 + $0xb0] sm:$0xff]
                  %251 = vst [vmem:[%s227 + $0x58] sm:$0xff] %v250
                  %v252 = vld [vmem:[%s226 + $0xc0] sm:$0xff]
                  %253 = vst [vmem:[%s227 + $0x60] sm:$0xff] %v252
                  %v254 = vld [vmem:[%s226 + $0xd0] sm:$0xff]
                  %255 = vst [vmem:[%s227 + $0x68] sm:$0xff] %v254
                  %v256 = vld [vmem:[%s226 + $0xe0] sm:$0xff]
                  %257 = vst [vmem:[%s227 + $0x70] sm:$0xff] %v256
                  %v258 = vld [vmem:[%s226 + $0xf0] sm:$0xff]
                  %259 = vst [vmem:[%s227 + $0x78] sm:$0xff] %v258
                  %v260 = vld [vmem:[%s226 + $0x100] sm:$0xff]
                  %261 = vst [vmem:[%s227 + $0x80] sm:$0xff] %v260
                  %v262 = vld [vmem:[%s226 + $0x110] sm:$0xff]
                  %263 = vst [vmem:[%s227 + $0x88] sm:$0xff] %v262
                  %v264 = vld [vmem:[%s226 + $0x120] sm:$0xff]
                  %265 = vst [vmem:[%s227 + $0x90] sm:$0xff] %v264
                  %v266 = vld [vmem:[%s226 + $0x130] sm:$0xff]
                  %267 = vst [vmem:[%s227 + $0x98] sm:$0xff] %v266
                  %v268 = vld [vmem:[%s226 + $0x140] sm:$0xff]
                  %269 = vst [vmem:[%s227 + $0xa0] sm:$0xff] %v268
                  %v270 = vld [vmem:[%s226 + $0x150] sm:$0xff]
                  %271 = vst [vmem:[%s227 + $0xa8] sm:$0xff] %v270
                  %v272 = vld [vmem:[%s226 + $0x160] sm:$0xff]
                  %273 = vst [vmem:[%s227 + $0xb0] sm:$0xff] %v272
                  %v274 = vld [vmem:[%s226 + $0x170] sm:$0xff]
                  %275 = vst [vmem:[%s227 + $0xb8] sm:$0xff] %v274
                $region56: #{_strm_apply.1} parent=50 // loop_footer
                  %s225 = sadd.s32 1, %s221
                $region57: #{_strm_apply.1} parent=50 // loop_footer_branch
                  %220 = sbr.rel target = $region53
                $region58: #{_strm_apply.1} parent=50 // loop_exit
                  _
              $region51: #{_strm_apply.1} parent=35 // pred_fallthru
                _
              // Predicated region
              $region59: #{_strm_apply.1} parent=35 // pred_check
                _
              $region60: #{_strm_apply.1} parent=35 // pred_check_branch
                %277 = sbr.rel target = $region62
              $region61: #{_strm_apply.1} parent=35 // pred_region
                _
              $region62: #{_strm_apply.1} parent=35 // pred_fallthru
                _
            $region36: #{_strm_apply.1} parent=31 // pred_fallthru
              _
            // Predicated region
            $region37: #{_strm_apply.1} parent=31 // pred_check
              _
            $region38: #{_strm_apply.1} parent=31 // pred_check_branch
              %160 = sbr.rel target = $region40
            $region39: #{_strm_apply.1} parent=31 // pred_region
              loop: start=0, step=1, limit=1
              $region41: #{_strm_apply.1} parent=39 // loop_pre_header
                _
              $region42: #{_strm_apply.1} parent=39 // loop_header
                %s163 = sphi 0, %s167
                %p164 = scmp.ge.s32.totalorder %s163, 1
                %s168 = sphi %s154, %s154
                %s169 = sphi %s150, %s150
              $region43: #{_strm_apply.1} parent=39 // loop_header_branch
                %166 = sbr.rel (%p164) target = $region47
              $region44: #{_strm_apply.1} parent=39 // loop_body
                %v170 = vld [vmem:[%s168] sm:$0xff]
                %171 = vst [vmem:[%s169] sm:$0xff] %v170
                %v172 = vld [vmem:[%s168 + $0x10] sm:$0xff]
                %173 = vst [vmem:[%s169 + $0x8] sm:$0xff] %v172
                %v174 = vld [vmem:[%s168 + $0x20] sm:$0xff]
                %175 = vst [vmem:[%s169 + $0x10] sm:$0xff] %v174
                %v176 = vld [vmem:[%s168 + $0x30] sm:$0xff]
                %177 = vst [vmem:[%s169 + $0x18] sm:$0xff] %v176
                %v178 = vld [vmem:[%s168 + $0x40] sm:$0xff]
                %179 = vst [vmem:[%s169 + $0x20] sm:$0xff] %v178
                %v180 = vld [vmem:[%s168 + $0x50] sm:$0xff]
                %181 = vst [vmem:[%s169 + $0x28] sm:$0xff] %v180
                %v182 = vld [vmem:[%s168 + $0x60] sm:$0xff]
                %183 = vst [vmem:[%s169 + $0x30] sm:$0xff] %v182
                %v184 = vld [vmem:[%s168 + $0x70] sm:$0xff]
                %185 = vst [vmem:[%s169 + $0x38] sm:$0xff] %v184
                %v186 = vld [vmem:[%s168 + $0x80] sm:$0xff]
                %187 = vst [vmem:[%s169 + $0x40] sm:$0xff] %v186
                %v188 = vld [vmem:[%s168 + $0x90] sm:$0xff]
                %189 = vst [vmem:[%s169 + $0x48] sm:$0xff] %v188
                %v190 = vld [vmem:[%s168 + $0xa0] sm:$0xff]
                %191 = vst [vmem:[%s169 + $0x50] sm:$0xff] %v190
                %v192 = vld [vmem:[%s168 + $0xb0] sm:$0xff]
                %193 = vst [vmem:[%s169 + $0x58] sm:$0xff] %v192
                %v194 = vld [vmem:[%s168 + $0xc0] sm:$0xff]
                %195 = vst [vmem:[%s169 + $0x60] sm:$0xff] %v194
                %v196 = vld [vmem:[%s168 + $0xd0] sm:$0xff]
                %197 = vst [vmem:[%s169 + $0x68] sm:$0xff] %v196
                %v198 = vld [vmem:[%s168 + $0xe0] sm:$0xff]
                %199 = vst [vmem:[%s169 + $0x70] sm:$0xff] %v198
                %v200 = vld [vmem:[%s168 + $0xf0] sm:$0xff]
                %201 = vst [vmem:[%s169 + $0x78] sm:$0xff] %v200
                %v202 = vld [vmem:[%s168 + $0x100] sm:$0xff]
                %203 = vst [vmem:[%s169 + $0x80] sm:$0xff] %v202
                %v204 = vld [vmem:[%s168 + $0x110] sm:$0xff]
                %205 = vst [vmem:[%s169 + $0x88] sm:$0xff] %v204
                %v206 = vld [vmem:[%s168 + $0x120] sm:$0xff]
                %207 = vst [vmem:[%s169 + $0x90] sm:$0xff] %v206
                %v208 = vld [vmem:[%s168 + $0x130] sm:$0xff]
                %209 = vst [vmem:[%s169 + $0x98] sm:$0xff] %v208
                %v210 = vld [vmem:[%s168 + $0x140] sm:$0xff]
                %211 = vst [vmem:[%s169 + $0xa0] sm:$0xff] %v210
                %v212 = vld [vmem:[%s168 + $0x150] sm:$0xff]
                %213 = vst [vmem:[%s169 + $0xa8] sm:$0xff] %v212
                %v214 = vld [vmem:[%s168 + $0x160] sm:$0xff]
                %215 = vst [vmem:[%s169 + $0xb0] sm:$0xff] %v214
                %v216 = vld [vmem:[%s168 + $0x170] sm:$0xff]
                %217 = vst [vmem:[%s169 + $0xb8] sm:$0xff] %v216
              $region45: #{_strm_apply.1} parent=39 // loop_footer
                %s167 = sadd.s32 1, %s163
              $region46: #{_strm_apply.1} parent=39 // loop_footer_branch
                %162 = sbr.rel target = $region42
              $region47: #{_strm_apply.1} parent=39 // loop_exit
                _
            $region40: #{_strm_apply.1} parent=31 // pred_fallthru
              _
          $region32: #{_strm_apply.1} parent=27 // pred_fallthru
            _
          %278 = vnop
        $region28: #{_strm_apply.1} parent=23 // pred_fallthru
          _
      $region24: #{_strm_apply.1} parent=5 // pred_fallthru
        _
      %p279 = scmp.le.s32.totalorder 1, %s9
      %p280 = scmp.lt.s32.totalorder %s9, 5
      %p281 = pnand %p279, %p280
      %p282 = pneg %p281
      // Predicated region
      $region63: #{_strm_apply.1} parent=5 // pred_check
        _
      $region64: #{_strm_apply.1} parent=5 // pred_check_branch
        %284 = sbr.rel (%p281) target = $region66
      $region65: #{_strm_apply.1} parent=5 // pred_region
        %s285 = ssub.s32 %s9, 1
        %s286 = sand.u32 %s36, 1
        %s287 = sand.u32 %s36, 1
        %s288 = smul.addr %s287, 192
        %s289 = scalar_lea.vmem [#allocation2], %s288
        // Predicated region
        $region67: #{_strm_apply.1} parent=65 // pred_check
          %p290 = pneg %p49
        $region68: #{_strm_apply.1} parent=65 // pred_check_branch
          %292 = sbr.rel (%p290) target = $region70
        $region69: #{_strm_apply.1} parent=65 // pred_region
          _
        $region70: #{_strm_apply.1} parent=65 // pred_fallthru
          _
        %s293 = sand.u32 %s36, 1
        %s294 = sand.u32 %s36, 1
        %s295 = smul.addr %s294, 192
        %s296 = scalar_lea.vmem [#allocation2], %s295
        %p297 = pneg %p49
        %p298 = pneg %p46
        %p299 = pneg %p70
        %p300 = pneg %p67
        %p301 = pneg %p91
        %p302 = pneg %p88
        %p303 = pneg %p119
        %p304 = pneg %p116
        %s305 = sand.u32 %s106, 1
        %s306 = sand.u32 %s106, 1
        %s307 = smul.addr %s306, 192
        %s308 = scalar_lea.vmem [#allocation3], %s307
        %v310 = vld [vmem:[%s289] sm:$0xff]
        %v311 = vld [vmem:[%s289 + $0x8] sm:$0xff]
        %v312 = vld [vmem:[%s289 + $0x10] sm:$0xff]
        %v313 = vld [vmem:[%s289 + $0x18] sm:$0xff]
        %v314 = vld [vmem:[%s289 + $0x20] sm:$0xff]
        %v315 = vld [vmem:[%s289 + $0x28] sm:$0xff]
        %v316 = vld [vmem:[%s289 + $0x30] sm:$0xff]
        %v317 = vld [vmem:[%s289 + $0x38] sm:$0xff]
        %v318 = vld [vmem:[%s289 + $0x40] sm:$0xff]
        %v319 = vld [vmem:[%s289 + $0x48] sm:$0xff]
        %v320 = vld [vmem:[%s289 + $0x50] sm:$0xff]
        %v321 = vld [vmem:[%s289 + $0x58] sm:$0xff]
        %v322 = vld [vmem:[%s289 + $0x60] sm:$0xff]
        %v323 = vld [vmem:[%s289 + $0x68] sm:$0xff]
        %v324 = vld [vmem:[%s289 + $0x70] sm:$0xff]
        %v325 = vld [vmem:[%s289 + $0x78] sm:$0xff]
        %v326 = vld [vmem:[%s289 + $0x80] sm:$0xff]
        %v327 = vld [vmem:[%s289 + $0x88] sm:$0xff]
        %v328 = vld [vmem:[%s289 + $0x90] sm:$0xff]
        %v329 = vld [vmem:[%s289 + $0x98] sm:$0xff]
        %v330 = vld [vmem:[%s289 + $0xa0] sm:$0xff]
        %v331 = vld [vmem:[%s289 + $0xa8] sm:$0xff]
        %v332 = vld [vmem:[%s289 + $0xb0] sm:$0xff]
        %v333 = vld [vmem:[%s289 + $0xb8] sm:$0xff]
        %v334 = vpack.c.bf16 %v311, %v310
        %v335 = vpack.c.bf16 %v313, %v312
        %v336 = vpack.c.bf16 %v315, %v314
        %v337 = vpack.c.bf16 %v317, %v316
        %v338 = vpack.c.bf16 %v319, %v318
        %v339 = vpack.c.bf16 %v321, %v320
        %v340 = vpack.c.bf16 %v323, %v322
        %v341 = vpack.c.bf16 %v325, %v324
        %v342 = vpack.c.bf16 %v327, %v326
        %v343 = vpack.c.bf16 %v329, %v328
        %v344 = vpack.c.bf16 %v331, %v330
        %v345 = vpack.c.bf16 %v333, %v332
        %v346 = vld [vmem:[%s1] sm:$0xff]
        %v347 = vld [vmem:[%s1 + $0x8] sm:$0xff]
        %v348 = vld [vmem:[%s1 + $0x10] sm:$0xff]
        %v349 = vld [vmem:[%s1 + $0x18] sm:$0xff]
        %v350 = vld [vmem:[%s1 + $0x20] sm:$0xff]
        %v351 = vld [vmem:[%s1 + $0x28] sm:$0xff]
        %v352 = vld [vmem:[%s1 + $0x30] sm:$0xff]
        %v353 = vld [vmem:[%s1 + $0x38] sm:$0xff]
        %v354 = vld [vmem:[%s1 + $0x40] sm:$0xff]
        %v355 = vld [vmem:[%s1 + $0x48] sm:$0xff]
        %v356 = vld [vmem:[%s1 + $0x50] sm:$0xff]
        %v357 = vld [vmem:[%s1 + $0x58] sm:$0xff]
        %v358 = vld [vmem:[%s1 + $0x60] sm:$0xff]
        %v359 = vld [vmem:[%s1 + $0x68] sm:$0xff]
        %v360 = vld [vmem:[%s1 + $0x70] sm:$0xff]
        %v361 = vld [vmem:[%s1 + $0x78] sm:$0xff]
        %v362 = vld [vmem:[%s1 + $0x80] sm:$0xff]
        %v363 = vld [vmem:[%s1 + $0x88] sm:$0xff]
        %v364 = vld [vmem:[%s1 + $0x90] sm:$0xff]
        %v365 = vld [vmem:[%s1 + $0x98] sm:$0xff]
        %v366 = vld [vmem:[%s1 + $0xa0] sm:$0xff]
        %v367 = vld [vmem:[%s1 + $0xa8] sm:$0xff]
        %v368 = vld [vmem:[%s1 + $0xb0] sm:$0xff]
        %v369 = vld [vmem:[%s1 + $0xb8] sm:$0xff]
        %v370 = vld [vmem:[%s2] sm:$0xff]
        %v371 = vld [vmem:[%s2 + $0x8] sm:$0xff]
        %v372 = vld [vmem:[%s2 + $0x10] sm:$0xff]
        %v373 = vld [vmem:[%s2 + $0x18] sm:$0xff]
        %v374 = vld [vmem:[%s2 + $0x20] sm:$0xff]
        %v375 = vld [vmem:[%s2 + $0x28] sm:$0xff]
        %v376 = vld [vmem:[%s2 + $0x30] sm:$0xff]
        %v377 = vld [vmem:[%s2 + $0x38] sm:$0xff]
        %v378 = vld [vmem:[%s2 + $0x40] sm:$0xff]
        %v379 = vld [vmem:[%s2 + $0x48] sm:$0xff]
        %v380 = vld [vmem:[%s2 + $0x50] sm:$0xff]
        %v381 = vld [vmem:[%s2 + $0x58] sm:$0xff]
        %v382 = vld [vmem:[%s2 + $0x60] sm:$0xff]
        %v383 = vld [vmem:[%s2 + $0x68] sm:$0xff]
        %v384 = vld [vmem:[%s2 + $0x70] sm:$0xff]
        %v385 = vld [vmem:[%s2 + $0x78] sm:$0xff]
        %v386 = vld [vmem:[%s2 + $0x80] sm:$0xff]
        %v387 = vld [vmem:[%s2 + $0x88] sm:$0xff]
        %v388 = vld [vmem:[%s2 + $0x90] sm:$0xff]
        %v389 = vld [vmem:[%s2 + $0x98] sm:$0xff]
        %v390 = vld [vmem:[%s2 + $0xa0] sm:$0xff]
        %v391 = vld [vmem:[%s2 + $0xa8] sm:$0xff]
        %v392 = vld [vmem:[%s2 + $0xb0] sm:$0xff]
        %v393 = vld [vmem:[%s2 + $0xb8] sm:$0xff]
        %395 = vset.pattern.permute.xlu0 0
        %396 = vperm.xlu0 %395, %v370
        %v397 = vpop.permute.xlu0 %396
        %400 = vset.pattern.permute.xlu0 0
        %401 = vperm.xlu0 %400, %v371
        %v402 = vpop.permute.xlu0 %401
        %405 = vset.pattern.permute.xlu0 0
        %406 = vperm.xlu0 %405, %v372
        %v407 = vpop.permute.xlu0 %406
        %410 = vset.pattern.permute.xlu0 0
        %411 = vperm.xlu0 %410, %v373
        %v412 = vpop.permute.xlu0 %411
        %415 = vset.pattern.permute.xlu0 0
        %416 = vperm.xlu0 %415, %v374
        %v417 = vpop.permute.xlu0 %416
        %420 = vset.pattern.permute.xlu0 0
        %421 = vperm.xlu0 %420, %v375
        %v422 = vpop.permute.xlu0 %421
        %425 = vset.pattern.permute.xlu0 0
        %426 = vperm.xlu0 %425, %v376
        %v427 = vpop.permute.xlu0 %426
        %430 = vset.pattern.permute.xlu0 0
        %431 = vperm.xlu0 %430, %v377
        %v432 = vpop.permute.xlu0 %431
        %435 = vset.pattern.permute.xlu0 0
        %436 = vperm.xlu0 %435, %v378
        %v437 = vpop.permute.xlu0 %436
        %440 = vset.pattern.permute.xlu0 0
        %441 = vperm.xlu0 %440, %v379
        %v442 = vpop.permute.xlu0 %441
        %445 = vset.pattern.permute.xlu0 0
        %446 = vperm.xlu0 %445, %v380
        %v447 = vpop.permute.xlu0 %446
        %450 = vset.pattern.permute.xlu0 0
        %451 = vperm.xlu0 %450, %v381
        %v452 = vpop.permute.xlu0 %451
        %455 = vset.pattern.permute.xlu0 0
        %456 = vperm.xlu0 %455, %v382
        %v457 = vpop.permute.xlu0 %456
        %460 = vset.pattern.permute.xlu0 0
        %461 = vperm.xlu0 %460, %v383
        %v462 = vpop.permute.xlu0 %461
        %465 = vset.pattern.permute.xlu0 0
        %466 = vperm.xlu0 %465, %v384
        %v467 = vpop.permute.xlu0 %466
        %470 = vset.pattern.permute.xlu0 0
        %471 = vperm.xlu0 %470, %v385
        %v472 = vpop.permute.xlu0 %471
        %475 = vset.pattern.permute.xlu0 0
        %476 = vperm.xlu0 %475, %v386
        %v477 = vpop.permute.xlu0 %476
        %480 = vset.pattern.permute.xlu0 0
        %481 = vperm.xlu0 %480, %v387
        %v482 = vpop.permute.xlu0 %481
        %485 = vset.pattern.permute.xlu0 0
        %486 = vperm.xlu0 %485, %v388
        %v487 = vpop.permute.xlu0 %486
        %490 = vset.pattern.permute.xlu0 0
        %491 = vperm.xlu0 %490, %v389
        %v492 = vpop.permute.xlu0 %491
        %495 = vset.pattern.permute.xlu0 0
        %496 = vperm.xlu0 %495, %v390
        %v497 = vpop.permute.xlu0 %496
        %500 = vset.pattern.permute.xlu0 0
        %501 = vperm.xlu0 %500, %v391
        %v502 = vpop.permute.xlu0 %501
        %505 = vset.pattern.permute.xlu0 0
        %506 = vperm.xlu0 %505, %v392
        %v507 = vpop.permute.xlu0 %506
        %510 = vset.pattern.permute.xlu0 0
        %511 = vperm.xlu0 %510, %v393
        %v512 = vpop.permute.xlu0 %511
        %v538 = vunpack.c.l.b16 %v346
        %v539 = vunpack.c.h.b16 %v346
        %v540 = vunpack.c.l.b16 %v347
        %v541 = vunpack.c.h.b16 %v347
        %v542 = vunpack.c.l.b16 %v348
        %v543 = vunpack.c.h.b16 %v348
        %v544 = vunpack.c.l.b16 %v349
        %v545 = vunpack.c.h.b16 %v349
        %v546 = vunpack.c.l.b16 %v350
        %v547 = vunpack.c.h.b16 %v350
        %v548 = vunpack.c.l.b16 %v351
        %v549 = vunpack.c.h.b16 %v351
        %v550 = vunpack.c.l.b16 %v352
        %v551 = vunpack.c.h.b16 %v352
        %v552 = vunpack.c.l.b16 %v353
        %v553 = vunpack.c.h.b16 %v353
        %v554 = vunpack.c.l.b16 %v354
        %v555 = vunpack.c.h.b16 %v354
        %v556 = vunpack.c.l.b16 %v355
        %v557 = vunpack.c.h.b16 %v355
        %v558 = vunpack.c.l.b16 %v356
        %v559 = vunpack.c.h.b16 %v356
        %v560 = vunpack.c.l.b16 %v357
        %v561 = vunpack.c.h.b16 %v357
        %v562 = vunpack.c.l.b16 %v358
        %v563 = vunpack.c.h.b16 %v358
        %v564 = vunpack.c.l.b16 %v359
        %v565 = vunpack.c.h.b16 %v359
        %v566 = vunpack.c.l.b16 %v360
        %v567 = vunpack.c.h.b16 %v360
        %v568 = vunpack.c.l.b16 %v361
        %v569 = vunpack.c.h.b16 %v361
        %v570 = vunpack.c.l.b16 %v362
        %v571 = vunpack.c.h.b16 %v362
        %v572 = vunpack.c.l.b16 %v363
        %v573 = vunpack.c.h.b16 %v363
        %v574 = vunpack.c.l.b16 %v364
        %v575 = vunpack.c.h.b16 %v364
        %v576 = vunpack.c.l.b16 %v365
        %v577 = vunpack.c.h.b16 %v365
        %v578 = vunpack.c.l.b16 %v366
        %v579 = vunpack.c.h.b16 %v366
        %v580 = vunpack.c.l.b16 %v367
        %v581 = vunpack.c.h.b16 %v367
        %v582 = vunpack.c.l.b16 %v368
        %v583 = vunpack.c.h.b16 %v368
        %v584 = vunpack.c.l.b16 %v369
        %v585 = vunpack.c.h.b16 %v369
        %v586 = vpack.c.b16 %v540, %v538
        %v587 = vpack.c.b16 %v541, %v539
        %v588 = vpack.c.b16 %v544, %v542
        %v589 = vpack.c.b16 %v545, %v543
        %v590 = vpack.c.b16 %v548, %v546
        %v591 = vpack.c.b16 %v549, %v547
        %v592 = vpack.c.b16 %v552, %v550
        %v593 = vpack.c.b16 %v553, %v551
        %v594 = vpack.c.b16 %v556, %v554
        %v595 = vpack.c.b16 %v557, %v555
        %v596 = vpack.c.b16 %v560, %v558
        %v597 = vpack.c.b16 %v561, %v559
        %v598 = vpack.c.b16 %v564, %v562
        %v599 = vpack.c.b16 %v565, %v563
        %v600 = vpack.c.b16 %v568, %v566
        %v601 = vpack.c.b16 %v569, %v567
        %v602 = vpack.c.b16 %v572, %v570
        %v603 = vpack.c.b16 %v573, %v571
        %v604 = vpack.c.b16 %v576, %v574
        %v605 = vpack.c.b16 %v577, %v575
        %v606 = vpack.c.b16 %v580, %v578
        %v607 = vpack.c.b16 %v581, %v579
        %v608 = vpack.c.b16 %v584, %v582
        %v609 = vpack.c.b16 %v585, %v583
        %vm622 = vcmask 523264
        %v624 = vsel %vm622, %v587, 0
        %v627 = vsel %vm622, %v589, 0
        %v630 = vsel %vm622, %v591, 0
        %v633 = vsel %vm622, %v593, 0
        %v636 = vsel %vm622, %v595, 0
        %v639 = vsel %vm622, %v597, 0
        %v642 = vsel %vm622, %v599, 0
        %v645 = vsel %vm622, %v601, 0
        %v648 = vsel %vm622, %v603, 0
        %v651 = vsel %vm622, %v605, 0
        %v654 = vsel %vm622, %v607, 0
        %v657 = vsel %vm622, %v609, 0
        %659 = vmatprep.subr.bf16.mxu0 0
        %660 = vmatpush1.bf16.msra.mxu0 %v334
        %661 = vmatprep.subr.bf16.mxu0 0
        %662 = vmatpush1.bf16.msra.mxu0 %v335
        %663 = vmatprep.subr.bf16.mxu0 0
        %664 = vmatpush1.bf16.msra.mxu0 %v336
        %665 = vmatprep.subr.bf16.mxu0 0
        %666 = vmatpush1.bf16.msra.mxu0 %v337
        %667 = vmatprep.subr.bf16.mxu0 0
        %668 = vmatpush1.bf16.msra.mxu0 %v338
        %669 = vmatprep.subr.bf16.mxu0 0
        %670 = vmatpush1.bf16.msra.mxu0 %v339
        %671 = vmatprep.subr.bf16.mxu0 0
        %672 = vmatpush1.bf16.msra.mxu0 %v340
        %673 = vmatprep.subr.bf16.mxu0 0
        %674 = vmatpush1.bf16.msra.mxu0 %v341
        %675 = vmatprep.subr.bf16.mxu0 0
        %676 = vmatpush1.bf16.msra.mxu0 %v342
        %677 = vmatprep.subr.bf16.mxu0 0
        %678 = vmatpush1.bf16.msra.mxu0 %v343
        %679 = vmatprep.subr.bf16.mxu0 0
        %680 = vmatpush1.bf16.msra.mxu0 %v344
        %681 = vmatprep.subr.bf16.mxu0 0
        %682 = vmatpush1.bf16.msra.mxu0 %v345
        %683 = vmatprep.subr.bf16.mxu0 0
        %684 = vmatpush1.bf16.msra.mxu0 0
        %685 = vmatprep.subr.bf16.mxu0 0
        %686 = vmatpush1.bf16.msra.mxu0 0
        %687 = vmatprep.subr.bf16.mxu0 0
        %688 = vmatpush1.bf16.msra.mxu0 0
        %689 = vmatprep.subr.bf16.mxu0 0
        %690 = vmatpush1.bf16.msra.mxu0 0
        %691 = vmatprep.mubr.bf16.mxu0 %v624
        %692 = vmatmul.mubr.bf16.gmra.mrb[0].mxu0 %v586
        %v693 = vpop.f32.mrb[0].mxu0
        %v694 = vadd.f32 %v397, %v693
        %v695 = vpop.f32.mrb[0].mxu0
        %v696 = vpop.f32.mrb[0].mxu0
        %v697 = vadd.f32 %v402, %v696
        %v698 = vpop.f32.mrb[0].mxu0
        %699 = vmatprep.mubr.bf16.mxu0 %v627
        %700 = vmatmul.mubr.bf16.gmra.mrb[0].mxu0 %v588
        %v701 = vpop.f32.mrb[0].mxu0
        %v702 = vadd.f32 %v407, %v701
        %v703 = vpop.f32.mrb[0].mxu0
        %v704 = vpop.f32.mrb[0].mxu0
        %v705 = vadd.f32 %v412, %v704
        %v706 = vpop.f32.mrb[0].mxu0
        %707 = vmatprep.mubr.bf16.mxu0 %v630
        %708 = vmatmul.mubr.bf16.gmra.mrb[0].mxu0 %v590
        %v709 = vpop.f32.mrb[0].mxu0
        %v710 = vadd.f32 %v417, %v709
        %v711 = vpop.f32.mrb[0].mxu0
        %v712 = vpop.f32.mrb[0].mxu0
        %v713 = vadd.f32 %v422, %v712
        %v714 = vpop.f32.mrb[0].mxu0
        %715 = vmatprep.mubr.bf16.mxu0 %v633
        %716 = vmatmul.mubr.bf16.gmra.mrb[0].mxu0 %v592
        %v717 = vpop.f32.mrb[0].mxu0
        %v718 = vadd.f32 %v427, %v717
        %v719 = vpop.f32.mrb[0].mxu0
        %v720 = vpop.f32.mrb[0].mxu0
        %v721 = vadd.f32 %v432, %v720
        %v722 = vpop.f32.mrb[0].mxu0
        %723 = vmatprep.mubr.bf16.mxu0 %v636
        %724 = vmatmul.mubr.bf16.gmra.mrb[0].mxu0 %v594
        %v725 = vpop.f32.mrb[0].mxu0
        %v726 = vadd.f32 %v437, %v725
        %v727 = vpop.f32.mrb[0].mxu0
        %v728 = vpop.f32.mrb[0].mxu0
        %v729 = vadd.f32 %v442, %v728
        %v730 = vpop.f32.mrb[0].mxu0
        %731 = vmatprep.mubr.bf16.mxu0 %v639
        %732 = vmatmul.mubr.bf16.gmra.mrb[0].mxu0 %v596
        %v733 = vpop.f32.mrb[0].mxu0
        %v734 = vadd.f32 %v447, %v733
        %v735 = vpop.f32.mrb[0].mxu0
        %v736 = vpop.f32.mrb[0].mxu0
        %v737 = vadd.f32 %v452, %v736
        %v738 = vpop.f32.mrb[0].mxu0
        %739 = vmatprep.mubr.bf16.mxu0 %v642
        %740 = vmatmul.mubr.bf16.gmra.mrb[0].mxu0 %v598
        %v741 = vpop.f32.mrb[0].mxu0
        %v742 = vadd.f32 %v457, %v741
        %v743 = vpop.f32.mrb[0].mxu0
        %v744 = vpop.f32.mrb[0].mxu0
        %v745 = vadd.f32 %v462, %v744
        %v746 = vpop.f32.mrb[0].mxu0
        %747 = vmatprep.mubr.bf16.mxu0 %v645
        %748 = vmatmul.mubr.bf16.gmra.mrb[0].mxu0 %v600
        %v749 = vpop.f32.mrb[0].mxu0
        %v750 = vadd.f32 %v467, %v749
        %v751 = vpop.f32.mrb[0].mxu0
        %v752 = vpop.f32.mrb[0].mxu0
        %v753 = vadd.f32 %v472, %v752
        %v754 = vpop.f32.mrb[0].mxu0
        %755 = vmatprep.mubr.bf16.mxu0 %v648
        %756 = vmatmul.mubr.bf16.gmra.mrb[0].mxu0 %v602
        %v757 = vpop.f32.mrb[0].mxu0
        %v758 = vadd.f32 %v477, %v757
        %v759 = vpop.f32.mrb[0].mxu0
        %v760 = vpop.f32.mrb[0].mxu0
        %v761 = vadd.f32 %v482, %v760
        %v762 = vpop.f32.mrb[0].mxu0
        %763 = vmatprep.mubr.bf16.mxu0 %v651
        %764 = vmatmul.mubr.bf16.gmra.mrb[0].mxu0 %v604
        %v765 = vpop.f32.mrb[0].mxu0
        %v766 = vadd.f32 %v487, %v765
        %v767 = vpop.f32.mrb[0].mxu0
        %v768 = vpop.f32.mrb[0].mxu0
        %v769 = vadd.f32 %v492, %v768
        %v770 = vpop.f32.mrb[0].mxu0
        %771 = vmatprep.mubr.bf16.mxu0 %v654
        %772 = vmatmul.mubr.bf16.gmra.mrb[0].mxu0 %v606
        %v773 = vpop.f32.mrb[0].mxu0
        %v774 = vadd.f32 %v497, %v773
        %v775 = vpop.f32.mrb[0].mxu0
        %v776 = vpop.f32.mrb[0].mxu0
        %v777 = vadd.f32 %v502, %v776
        %v778 = vpop.f32.mrb[0].mxu0
        %779 = vmatprep.mubr.bf16.mxu0 %v657
        %780 = vmatmul.mubr.bf16.gmra.mrb[0].mxu0 %v608
        %v781 = vpop.f32.mrb[0].mxu0
        %v782 = vadd.f32 %v507, %v781
        %v783 = vpop.f32.mrb[0].mxu0
        %v784 = vpop.f32.mrb[0].mxu0
        %v785 = vadd.f32 %v512, %v784
        %v786 = vpop.f32.mrb[0].mxu0
        %787 = vdwg.mxu0
        %v788 = vmax.f32 %v694, 0.0
        %v789 = vmax.f32 %v697, 0.0
        %v790 = vmax.f32 %v702, 0.0
        %v791 = vmax.f32 %v705, 0.0
        %v792 = vmax.f32 %v710, 0.0
        %v793 = vmax.f32 %v713, 0.0
        %v794 = vmax.f32 %v718, 0.0
        %v795 = vmax.f32 %v721, 0.0
        %v796 = vmax.f32 %v726, 0.0
        %v797 = vmax.f32 %v729, 0.0
        %v798 = vmax.f32 %v734, 0.0
        %v799 = vmax.f32 %v737, 0.0
        %v800 = vmax.f32 %v742, 0.0
        %v801 = vmax.f32 %v745, 0.0
        %v802 = vmax.f32 %v750, 0.0
        %v803 = vmax.f32 %v753, 0.0
        %v804 = vmax.f32 %v758, 0.0
        %v805 = vmax.f32 %v761, 0.0
        %v806 = vmax.f32 %v766, 0.0
        %v807 = vmax.f32 %v769, 0.0
        %v808 = vmax.f32 %v774, 0.0
        %v809 = vmax.f32 %v777, 0.0
        %v810 = vmax.f32 %v782, 0.0
        %v811 = vmax.f32 %v785, 0.0
        %s812 = scalar_lea.vmem %s1, 192
        %v813 = vld [vmem:[%s812] sm:$0xff]
        %v814 = vld [vmem:[%s812 + $0x8] sm:$0xff]
        %v815 = vld [vmem:[%s812 + $0x10] sm:$0xff]
        %v816 = vld [vmem:[%s812 + $0x18] sm:$0xff]
        %v817 = vld [vmem:[%s812 + $0x20] sm:$0xff]
        %v818 = vld [vmem:[%s812 + $0x28] sm:$0xff]
        %v819 = vld [vmem:[%s812 + $0x30] sm:$0xff]
        %v820 = vld [vmem:[%s812 + $0x38] sm:$0xff]
        %v821 = vld [vmem:[%s812 + $0x40] sm:$0xff]
        %v822 = vld [vmem:[%s812 + $0x48] sm:$0xff]
        %v823 = vld [vmem:[%s812 + $0x50] sm:$0xff]
        %v824 = vld [vmem:[%s812 + $0x58] sm:$0xff]
        %v825 = vld [vmem:[%s812 + $0x60] sm:$0xff]
        %v826 = vld [vmem:[%s812 + $0x68] sm:$0xff]
        %v827 = vld [vmem:[%s812 + $0x70] sm:$0xff]
        %v828 = vld [vmem:[%s812 + $0x78] sm:$0xff]
        %v829 = vld [vmem:[%s812 + $0x80] sm:$0xff]
        %v830 = vld [vmem:[%s812 + $0x88] sm:$0xff]
        %v831 = vld [vmem:[%s812 + $0x90] sm:$0xff]
        %v832 = vld [vmem:[%s812 + $0x98] sm:$0xff]
        %v833 = vld [vmem:[%s812 + $0xa0] sm:$0xff]
        %v834 = vld [vmem:[%s812 + $0xa8] sm:$0xff]
        %v835 = vld [vmem:[%s812 + $0xb0] sm:$0xff]
        %v836 = vld [vmem:[%s812 + $0xb8] sm:$0xff]
        %v837 = vpack.c.bf16 %v789, %v788
        %v838 = vpack.c.bf16 %v791, %v790
        %v839 = vpack.c.bf16 %v793, %v792
        %v840 = vpack.c.bf16 %v795, %v794
        %v841 = vpack.c.bf16 %v797, %v796
        %v842 = vpack.c.bf16 %v799, %v798
        %v843 = vpack.c.bf16 %v801, %v800
        %v844 = vpack.c.bf16 %v803, %v802
        %v845 = vpack.c.bf16 %v805, %v804
        %v846 = vpack.c.bf16 %v807, %v806
        %v847 = vpack.c.bf16 %v809, %v808
        %v848 = vpack.c.bf16 %v811, %v810
        %s849 = scalar_lea.vmem %s2, 192
        %v850 = vld [vmem:[%s849] sm:$0xff]
        %v851 = vld [vmem:[%s849 + $0x8] sm:$0xff]
        %v852 = vld [vmem:[%s849 + $0x10] sm:$0xff]
        %v853 = vld [vmem:[%s849 + $0x18] sm:$0xff]
        %v854 = vld [vmem:[%s849 + $0x20] sm:$0xff]
        %v855 = vld [vmem:[%s849 + $0x28] sm:$0xff]
        %v856 = vld [vmem:[%s849 + $0x30] sm:$0xff]
        %v857 = vld [vmem:[%s849 + $0x38] sm:$0xff]
        %v858 = vld [vmem:[%s849 + $0x40] sm:$0xff]
        %v859 = vld [vmem:[%s849 + $0x48] sm:$0xff]
        %v860 = vld [vmem:[%s849 + $0x50] sm:$0xff]
        %v861 = vld [vmem:[%s849 + $0x58] sm:$0xff]
        %v862 = vld [vmem:[%s849 + $0x60] sm:$0xff]
        %v863 = vld [vmem:[%s849 + $0x68] sm:$0xff]
        %v864 = vld [vmem:[%s849 + $0x70] sm:$0xff]
        %v865 = vld [vmem:[%s849 + $0x78] sm:$0xff]
        %v866 = vld [vmem:[%s849 + $0x80] sm:$0xff]
        %v867 = vld [vmem:[%s849 + $0x88] sm:$0xff]
        %v868 = vld [vmem:[%s849 + $0x90] sm:$0xff]
        %v869 = vld [vmem:[%s849 + $0x98] sm:$0xff]
        %v870 = vld [vmem:[%s849 + $0xa0] sm:$0xff]
        %v871 = vld [vmem:[%s849 + $0xa8] sm:$0xff]
        %v872 = vld [vmem:[%s849 + $0xb0] sm:$0xff]
        %v873 = vld [vmem:[%s849 + $0xb8] sm:$0xff]
        %875 = vset.pattern.permute.xlu0 0
        %876 = vperm.xlu0 %875, %v850
        %v877 = vpop.permute.xlu0 %876
        %880 = vset.pattern.permute.xlu0 0
        %881 = vperm.xlu0 %880, %v851
        %v882 = vpop.permute.xlu0 %881
        %885 = vset.pattern.permute.xlu0 0
        %886 = vperm.xlu0 %885, %v852
        %v887 = vpop.permute.xlu0 %886
        %890 = vset.pattern.permute.xlu0 0
        %891 = vperm.xlu0 %890, %v853
        %v892 = vpop.permute.xlu0 %891
        %895 = vset.pattern.permute.xlu0 0
        %896 = vperm.xlu0 %895, %v854
        %v897 = vpop.permute.xlu0 %896
        %900 = vset.pattern.permute.xlu0 0
        %901 = vperm.xlu0 %900, %v855
        %v902 = vpop.permute.xlu0 %901
        %905 = vset.pattern.permute.xlu0 0
        %906 = vperm.xlu0 %905, %v856
        %v907 = vpop.permute.xlu0 %906
        %910 = vset.pattern.permute.xlu0 0
        %911 = vperm.xlu0 %910, %v857
        %v912 = vpop.permute.xlu0 %911
        %915 = vset.pattern.permute.xlu0 0
        %916 = vperm.xlu0 %915, %v858
        %v917 = vpop.permute.xlu0 %916
        %920 = vset.pattern.permute.xlu0 0
        %921 = vperm.xlu0 %920, %v859
        %v922 = vpop.permute.xlu0 %921
        %925 = vset.pattern.permute.xlu0 0
        %926 = vperm.xlu0 %925, %v860
        %v927 = vpop.permute.xlu0 %926
        %930 = vset.pattern.permute.xlu0 0
        %931 = vperm.xlu0 %930, %v861
        %v932 = vpop.permute.xlu0 %931
        %935 = vset.pattern.permute.xlu0 0
        %936 = vperm.xlu0 %935, %v862
        %v937 = vpop.permute.xlu0 %936
        %940 = vset.pattern.permute.xlu0 0
        %941 = vperm.xlu0 %940, %v863
        %v942 = vpop.permute.xlu0 %941
        %945 = vset.pattern.permute.xlu0 0
        %946 = vperm.xlu0 %945, %v864
        %v947 = vpop.permute.xlu0 %946
        %950 = vset.pattern.permute.xlu0 0
        %951 = vperm.xlu0 %950, %v865
        %v952 = vpop.permute.xlu0 %951
        %955 = vset.pattern.permute.xlu0 0
        %956 = vperm.xlu0 %955, %v866
        %v957 = vpop.permute.xlu0 %956
        %960 = vset.pattern.permute.xlu0 0
        %961 = vperm.xlu0 %960, %v867
        %v962 = vpop.permute.xlu0 %961
        %965 = vset.pattern.permute.xlu0 0
        %966 = vperm.xlu0 %965, %v868
        %v967 = vpop.permute.xlu0 %966
        %970 = vset.pattern.permute.xlu0 0
        %971 = vperm.xlu0 %970, %v869
        %v972 = vpop.permute.xlu0 %971
        %975 = vset.pattern.permute.xlu0 0
        %976 = vperm.xlu0 %975, %v870
        %v977 = vpop.permute.xlu0 %976
        %980 = vset.pattern.permute.xlu0 0
        %981 = vperm.xlu0 %980, %v871
        %v982 = vpop.permute.xlu0 %981
        %985 = vset.pattern.permute.xlu0 0
        %986 = vperm.xlu0 %985, %v872
        %v987 = vpop.permute.xlu0 %986
        %990 = vset.pattern.permute.xlu0 0
        %991 = vperm.xlu0 %990, %v873
        %v992 = vpop.permute.xlu0 %991
        %v1018 = vunpack.c.l.b16 %v813
        %v1019 = vunpack.c.h.b16 %v813
        %v1020 = vunpack.c.l.b16 %v814
        %v1021 = vunpack.c.h.b16 %v814
        %v1022 = vunpack.c.l.b16 %v815
        %v1023 = vunpack.c.h.b16 %v815
        %v1024 = vunpack.c.l.b16 %v816
        %v1025 = vunpack.c.h.b16 %v816
        %v1026 = vunpack.c.l.b16 %v817
        %v1027 = vunpack.c.h.b16 %v817
        %v1028 = vunpack.c.l.b16 %v818
        %v1029 = vunpack.c.h.b16 %v818
        %v1030 = vunpack.c.l.b16 %v819
        %v1031 = vunpack.c.h.b16 %v819
        %v1032 = vunpack.c.l.b16 %v820
        %v1033 = vunpack.c.h.b16 %v820
        %v1034 = vunpack.c.l.b16 %v821
        %v1035 = vunpack.c.h.b16 %v821
        %v1036 = vunpack.c.l.b16 %v822
        %v1037 = vunpack.c.h.b16 %v822
        %v1038 = vunpack.c.l.b16 %v823
        %v1039 = vunpack.c.h.b16 %v823
        %v1040 = vunpack.c.l.b16 %v824
        %v1041 = vunpack.c.h.b16 %v824
        %v1042 = vunpack.c.l.b16 %v825
        %v1043 = vunpack.c.h.b16 %v825
        %v1044 = vunpack.c.l.b16 %v826
        %v1045 = vunpack.c.h.b16 %v826
        %v1046 = vunpack.c.l.b16 %v827
        %v1047 = vunpack.c.h.b16 %v827
        %v1048 = vunpack.c.l.b16 %v828
        %v1049 = vunpack.c.h.b16 %v828
        %v1050 = vunpack.c.l.b16 %v829
        %v1051 = vunpack.c.h.b16 %v829
        %v1052 = vunpack.c.l.b16 %v830
        %v1053 = vunpack.c.h.b16 %v830
        %v1054 = vunpack.c.l.b16 %v831
        %v1055 = vunpack.c.h.b16 %v831
        %v1056 = vunpack.c.l.b16 %v832
        %v1057 = vunpack.c.h.b16 %v832
        %v1058 = vunpack.c.l.b16 %v833
        %v1059 = vunpack.c.h.b16 %v833
        %v1060 = vunpack.c.l.b16 %v834
        %v1061 = vunpack.c.h.b16 %v834
        %v1062 = vunpack.c.l.b16 %v835
        %v1063 = vunpack.c.h.b16 %v835
        %v1064 = vunpack.c.l.b16 %v836
        %v1065 = vunpack.c.h.b16 %v836
        %v1066 = vpack.c.b16 %v1020, %v1018
        %v1067 = vpack.c.b16 %v1021, %v1019
        %v1068 = vpack.c.b16 %v1024, %v1022
        %v1069 = vpack.c.b16 %v1025, %v1023
        %v1070 = vpack.c.b16 %v1028, %v1026
        %v1071 = vpack.c.b16 %v1029, %v1027
        %v1072 = vpack.c.b16 %v1032, %v1030
        %v1073 = vpack.c.b16 %v1033, %v1031
        %v1074 = vpack.c.b16 %v1036, %v1034
        %v1075 = vpack.c.b16 %v1037, %v1035
        %v1076 = vpack.c.b16 %v1040, %v1038
        %v1077 = vpack.c.b16 %v1041, %v1039
        %v1078 = vpack.c.b16 %v1044, %v1042
        %v1079 = vpack.c.b16 %v1045, %v1043
        %v1080 = vpack.c.b16 %v1048, %v1046
        %v1081 = vpack.c.b16 %v1049, %v1047
        %v1082 = vpack.c.b16 %v1052, %v1050
        %v1083 = vpack.c.b16 %v1053, %v1051
        %v1084 = vpack.c.b16 %v1056, %v1054
        %v1085 = vpack.c.b16 %v1057, %v1055
        %v1086 = vpack.c.b16 %v1060, %v1058
        %v1087 = vpack.c.b16 %v1061, %v1059
        %v1088 = vpack.c.b16 %v1064, %v1062
        %v1089 = vpack.c.b16 %v1065, %v1063
        %v1103 = vsel %vm622, %v1067, 0
        %v1106 = vsel %vm622, %v1069, 0
        %v1109 = vsel %vm622, %v1071, 0
        %v1112 = vsel %vm622, %v1073, 0
        %v1115 = vsel %vm622, %v1075, 0
        %v1118 = vsel %vm622, %v1077, 0
        %v1121 = vsel %vm622, %v1079, 0
        %v1124 = vsel %vm622, %v1081, 0
        %v1127 = vsel %vm622, %v1083, 0
        %v1130 = vsel %vm622, %v1085, 0
        %v1133 = vsel %vm622, %v1087, 0
        %v1136 = vsel %vm622, %v1089, 0
        %1138 = vmatprep.subr.bf16.mxu0 0
        %1139 = vmatpush1.bf16.msra.mxu0 %v837
        %1140 = vmatprep.subr.bf16.mxu0 0
        %1141 = vmatpush1.bf16.msra.mxu0 %v838
        %1142 = vmatprep.subr.bf16.mxu0 0
        %1143 = vmatpush1.bf16.msra.mxu0 %v839
        %1144 = vmatprep.subr.bf16.mxu0 0
        %1145 = vmatpush1.bf16.msra.mxu0 %v840
        %1146 = vmatprep.subr.bf16.mxu0 0
        %1147 = vmatpush1.bf16.msra.mxu0 %v841
        %1148 = vmatprep.subr.bf16.mxu0 0
        %1149 = vmatpush1.bf16.msra.mxu0 %v842
        %1150 = vmatprep.subr.bf16.mxu0 0
        %1151 = vmatpush1.bf16.msra.mxu0 %v843
        %1152 = vmatprep.subr.bf16.mxu0 0
        %1153 = vmatpush1.bf16.msra.mxu0 %v844
        %1154 = vmatprep.subr.bf16.mxu0 0
        %1155 = vmatpush1.bf16.msra.mxu0 %v845
        %1156 = vmatprep.subr.bf16.mxu0 0
        %1157 = vmatpush1.bf16.msra.mxu0 %v846
        %1158 = vmatprep.subr.bf16.mxu0 0
        %1159 = vmatpush1.bf16.msra.mxu0 %v847
        %1160 = vmatprep.subr.bf16.mxu0 0
        %1161 = vmatpush1.bf16.msra.mxu0 %v848
        %1162 = vmatprep.subr.bf16.mxu0 0
        %1163 = vmatpush1.bf16.msra.mxu0 0
        %1164 = vmatprep.subr.bf16.mxu0 0
        %1165 = vmatpush1.bf16.msra.mxu0 0
        %1166 = vmatprep.subr.bf16.mxu0 0
        %1167 = vmatpush1.bf16.msra.mxu0 0
        %1168 = vmatprep.subr.bf16.mxu0 0
        %1169 = vmatpush1.bf16.msra.mxu0 0
        %1170 = vmatprep.mubr.bf16.mxu0 %v1103
        %1171 = vmatmul.mubr.bf16.gmra.mrb[0].mxu0 %v1066
        %v1172 = vpop.f32.mrb[0].mxu0
        %v1173 = vadd.f32 %v877, %v1172
        %v1174 = vpop.f32.mrb[0].mxu0
        %v1175 = vpop.f32.mrb[0].mxu0
        %v1176 = vadd.f32 %v882, %v1175
        %v1177 = vpop.f32.mrb[0].mxu0
        %1178 = vmatprep.mubr.bf16.mxu0 %v1106
        %1179 = vmatmul.mubr.bf16.gmra.mrb[0].mxu0 %v1068
        %v1180 = vpop.f32.mrb[0].mxu0
        %v1181 = vadd.f32 %v887, %v1180
        %v1182 = vpop.f32.mrb[0].mxu0
        %v1183 = vpop.f32.mrb[0].mxu0
        %v1184 = vadd.f32 %v892, %v1183
        %v1185 = vpop.f32.mrb[0].mxu0
        %1186 = vmatprep.mubr.bf16.mxu0 %v1109
        %1187 = vmatmul.mubr.bf16.gmra.mrb[0].mxu0 %v1070
        %v1188 = vpop.f32.mrb[0].mxu0
        %v1189 = vadd.f32 %v897, %v1188
        %v1190 = vpop.f32.mrb[0].mxu0
        %v1191 = vpop.f32.mrb[0].mxu0
        %v1192 = vadd.f32 %v902, %v1191
        %v1193 = vpop.f32.mrb[0].mxu0
        %1194 = vmatprep.mubr.bf16.mxu0 %v1112
        %1195 = vmatmul.mubr.bf16.gmra.mrb[0].mxu0 %v1072
        %v1196 = vpop.f32.mrb[0].mxu0
        %v1197 = vadd.f32 %v907, %v1196
        %v1198 = vpop.f32.mrb[0].mxu0
        %v1199 = vpop.f32.mrb[0].mxu0
        %v1200 = vadd.f32 %v912, %v1199
        %v1201 = vpop.f32.mrb[0].mxu0
        %1202 = vmatprep.mubr.bf16.mxu0 %v1115
        %1203 = vmatmul.mubr.bf16.gmra.mrb[0].mxu0 %v1074
        %v1204 = vpop.f32.mrb[0].mxu0
        %v1205 = vadd.f32 %v917, %v1204
        %v1206 = vpop.f32.mrb[0].mxu0
        %v1207 = vpop.f32.mrb[0].mxu0
        %v1208 = vadd.f32 %v922, %v1207
        %v1209 = vpop.f32.mrb[0].mxu0
        %1210 = vmatprep.mubr.bf16.mxu0 %v1118
        %1211 = vmatmul.mubr.bf16.gmra.mrb[0].mxu0 %v1076
        %v1212 = vpop.f32.mrb[0].mxu0
        %v1213 = vadd.f32 %v927, %v1212
        %v1214 = vpop.f32.mrb[0].mxu0
        %v1215 = vpop.f32.mrb[0].mxu0
        %v1216 = vadd.f32 %v932, %v1215
        %v1217 = vpop.f32.mrb[0].mxu0
        %1218 = vmatprep.mubr.bf16.mxu0 %v1121
        %1219 = vmatmul.mubr.bf16.gmra.mrb[0].mxu0 %v1078
        %v1220 = vpop.f32.mrb[0].mxu0
        %v1221 = vadd.f32 %v937, %v1220
        %v1222 = vpop.f32.mrb[0].mxu0
        %v1223 = vpop.f32.mrb[0].mxu0
        %v1224 = vadd.f32 %v942, %v1223
        %v1225 = vpop.f32.mrb[0].mxu0
        %1226 = vmatprep.mubr.bf16.mxu0 %v1124
        %1227 = vmatmul.mubr.bf16.gmra.mrb[0].mxu0 %v1080
        %v1228 = vpop.f32.mrb[0].mxu0
        %v1229 = vadd.f32 %v947, %v1228
        %v1230 = vpop.f32.mrb[0].mxu0
        %v1231 = vpop.f32.mrb[0].mxu0
        %v1232 = vadd.f32 %v952, %v1231
        %v1233 = vpop.f32.mrb[0].mxu0
        %1234 = vmatprep.mubr.bf16.mxu0 %v1127
        %1235 = vmatmul.mubr.bf16.gmra.mrb[0].mxu0 %v1082
        %v1236 = vpop.f32.mrb[0].mxu0
        %v1237 = vadd.f32 %v957, %v1236
        %v1238 = vpop.f32.mrb[0].mxu0
        %v1239 = vpop.f32.mrb[0].mxu0
        %v1240 = vadd.f32 %v962, %v1239
        %v1241 = vpop.f32.mrb[0].mxu0
        %1242 = vmatprep.mubr.bf16.mxu0 %v1130
        %1243 = vmatmul.mubr.bf16.gmra.mrb[0].mxu0 %v1084
        %v1244 = vpop.f32.mrb[0].mxu0
        %v1245 = vadd.f32 %v967, %v1244
        %v1246 = vpop.f32.mrb[0].mxu0
        %v1247 = vpop.f32.mrb[0].mxu0
        %v1248 = vadd.f32 %v972, %v1247
        %v1249 = vpop.f32.mrb[0].mxu0
        %1250 = vmatprep.mubr.bf16.mxu0 %v1133
        %1251 = vmatmul.mubr.bf16.gmra.mrb[0].mxu0 %v1086
        %v1252 = vpop.f32.mrb[0].mxu0
        %v1253 = vadd.f32 %v977, %v1252
        %v1254 = vpop.f32.mrb[0].mxu0
        %v1255 = vpop.f32.mrb[0].mxu0
        %v1256 = vadd.f32 %v982, %v1255
        %v1257 = vpop.f32.mrb[0].mxu0
        %1258 = vmatprep.mubr.bf16.mxu0 %v1136
        %1259 = vmatmul.mubr.bf16.gmra.mrb[0].mxu0 %v1088
        %v1260 = vpop.f32.mrb[0].mxu0
        %v1261 = vadd.f32 %v987, %v1260
        %v1262 = vpop.f32.mrb[0].mxu0
        %v1263 = vpop.f32.mrb[0].mxu0
        %v1264 = vadd.f32 %v992, %v1263
        %v1265 = vpop.f32.mrb[0].mxu0
        %1266 = vdwg.mxu0
        %v1267 = vadd.f32 %v1173, %v310
        %v1268 = vadd.f32 %v1176, %v311
        %v1269 = vadd.f32 %v1181, %v312
        %v1270 = vadd.f32 %v1184, %v313
        %v1271 = vadd.f32 %v1189, %v314
        %v1272 = vadd.f32 %v1192, %v315
        %v1273 = vadd.f32 %v1197, %v316
        %v1274 = vadd.f32 %v1200, %v317
        %v1275 = vadd.f32 %v1205, %v318
        %v1276 = vadd.f32 %v1208, %v319
        %v1277 = vadd.f32 %v1213, %v320
        %v1278 = vadd.f32 %v1216, %v321
        %v1279 = vadd.f32 %v1221, %v322
        %v1280 = vadd.f32 %v1224, %v323
        %v1281 = vadd.f32 %v1229, %v324
        %v1282 = vadd.f32 %v1232, %v325
        %v1283 = vadd.f32 %v1237, %v326
        %v1284 = vadd.f32 %v1240, %v327
        %v1285 = vadd.f32 %v1245, %v328
        %v1286 = vadd.f32 %v1248, %v329
        %v1287 = vadd.f32 %v1253, %v330
        %v1288 = vadd.f32 %v1256, %v331
        %v1289 = vadd.f32 %v1261, %v332
        %v1290 = vadd.f32 %v1264, %v333
        %v1291 = vmax.f32 %v1267, 0.0
        %v1292 = vmax.f32 %v1268, 0.0
        %v1293 = vmax.f32 %v1269, 0.0
        %v1294 = vmax.f32 %v1270, 0.0
        %v1295 = vmax.f32 %v1271, 0.0
        %v1296 = vmax.f32 %v1272, 0.0
        %v1297 = vmax.f32 %v1273, 0.0
        %v1298 = vmax.f32 %v1274, 0.0
        %v1299 = vmax.f32 %v1275, 0.0
        %v1300 = vmax.f32 %v1276, 0.0
        %v1301 = vmax.f32 %v1277, 0.0
        %v1302 = vmax.f32 %v1278, 0.0
        %v1303 = vmax.f32 %v1279, 0.0
        %v1304 = vmax.f32 %v1280, 0.0
        %v1305 = vmax.f32 %v1281, 0.0
        %v1306 = vmax.f32 %v1282, 0.0
        %v1307 = vmax.f32 %v1283, 0.0
        %v1308 = vmax.f32 %v1284, 0.0
        %v1309 = vmax.f32 %v1285, 0.0
        %v1310 = vmax.f32 %v1286, 0.0
        %v1311 = vmax.f32 %v1287, 0.0
        %v1312 = vmax.f32 %v1288, 0.0
        %v1313 = vmax.f32 %v1289, 0.0
        %v1314 = vmax.f32 %v1290, 0.0
        %s1315 = scalar_lea.vmem %s1, 576
        %v1316 = vld [vmem:[%s1315] sm:$0xff]
        %v1317 = vld [vmem:[%s1315 + $0x8] sm:$0xff]
        %v1318 = vld [vmem:[%s1315 + $0x10] sm:$0xff]
        %v1319 = vld [vmem:[%s1315 + $0x18] sm:$0xff]
        %v1320 = vld [vmem:[%s1315 + $0x20] sm:$0xff]
        %v1321 = vld [vmem:[%s1315 + $0x28] sm:$0xff]
        %v1322 = vld [vmem:[%s1315 + $0x30] sm:$0xff]
        %v1323 = vld [vmem:[%s1315 + $0x38] sm:$0xff]
        %v1324 = vld [vmem:[%s1315 + $0x40] sm:$0xff]
        %v1325 = vld [vmem:[%s1315 + $0x48] sm:$0xff]
        %v1326 = vld [vmem:[%s1315 + $0x50] sm:$0xff]
        %v1327 = vld [vmem:[%s1315 + $0x58] sm:$0xff]
        %v1328 = vld [vmem:[%s1315 + $0x60] sm:$0xff]
        %v1329 = vld [vmem:[%s1315 + $0x68] sm:$0xff]
        %v1330 = vld [vmem:[%s1315 + $0x70] sm:$0xff]
        %v1331 = vld [vmem:[%s1315 + $0x78] sm:$0xff]
        %v1332 = vld [vmem:[%s1315 + $0x80] sm:$0xff]
        %v1333 = vld [vmem:[%s1315 + $0x88] sm:$0xff]
        %v1334 = vld [vmem:[%s1315 + $0x90] sm:$0xff]
        %v1335 = vld [vmem:[%s1315 + $0x98] sm:$0xff]
        %v1336 = vld [vmem:[%s1315 + $0xa0] sm:$0xff]
        %v1337 = vld [vmem:[%s1315 + $0xa8] sm:$0xff]
        %v1338 = vld [vmem:[%s1315 + $0xb0] sm:$0xff]
        %v1339 = vld [vmem:[%s1315 + $0xb8] sm:$0xff]
        %v1364 = vunpack.c.l.b16 %v1316
        %v1365 = vunpack.c.h.b16 %v1316
        %v1366 = vunpack.c.l.b16 %v1317
        %v1367 = vunpack.c.h.b16 %v1317
        %v1368 = vunpack.c.l.b16 %v1318
        %v1369 = vunpack.c.h.b16 %v1318
        %v1370 = vunpack.c.l.b16 %v1319
        %v1371 = vunpack.c.h.b16 %v1319
        %v1372 = vunpack.c.l.b16 %v1320
        %v1373 = vunpack.c.h.b16 %v1320
        %v1374 = vunpack.c.l.b16 %v1321
        %v1375 = vunpack.c.h.b16 %v1321
        %v1376 = vunpack.c.l.b16 %v1322
        %v1377 = vunpack.c.h.b16 %v1322
        %v1378 = vunpack.c.l.b16 %v1323
        %v1379 = vunpack.c.h.b16 %v1323
        %v1380 = vunpack.c.l.b16 %v1324
        %v1381 = vunpack.c.h.b16 %v1324
        %v1382 = vunpack.c.l.b16 %v1325
        %v1383 = vunpack.c.h.b16 %v1325
        %v1384 = vunpack.c.l.b16 %v1326
        %v1385 = vunpack.c.h.b16 %v1326
        %v1386 = vunpack.c.l.b16 %v1327
        %v1387 = vunpack.c.h.b16 %v1327
        %v1388 = vunpack.c.l.b16 %v1328
        %v1389 = vunpack.c.h.b16 %v1328
        %v1390 = vunpack.c.l.b16 %v1329
        %v1391 = vunpack.c.h.b16 %v1329
        %v1392 = vunpack.c.l.b16 %v1330
        %v1393 = vunpack.c.h.b16 %v1330
        %v1394 = vunpack.c.l.b16 %v1331
        %v1395 = vunpack.c.h.b16 %v1331
        %v1396 = vunpack.c.l.b16 %v1332
        %v1397 = vunpack.c.h.b16 %v1332
        %v1398 = vunpack.c.l.b16 %v1333
        %v1399 = vunpack.c.h.b16 %v1333
        %v1400 = vunpack.c.l.b16 %v1334
        %v1401 = vunpack.c.h.b16 %v1334
        %v1402 = vunpack.c.l.b16 %v1335
        %v1403 = vunpack.c.h.b16 %v1335
        %v1404 = vunpack.c.l.b16 %v1336
        %v1405 = vunpack.c.h.b16 %v1336
        %v1406 = vunpack.c.l.b16 %v1337
        %v1407 = vunpack.c.h.b16 %v1337
        %v1408 = vunpack.c.l.b16 %v1338
        %v1409 = vunpack.c.h.b16 %v1338
        %v1410 = vunpack.c.l.b16 %v1339
        %v1411 = vunpack.c.h.b16 %v1339
        %v1412 = vpack.c.b16 %v1366, %v1364
        %v1413 = vpack.c.b16 %v1367, %v1365
        %v1414 = vpack.c.b16 %v1370, %v1368
        %v1415 = vpack.c.b16 %v1371, %v1369
        %v1416 = vpack.c.b16 %v1374, %v1372
        %v1417 = vpack.c.b16 %v1375, %v1373
        %v1418 = vpack.c.b16 %v1378, %v1376
        %v1419 = vpack.c.b16 %v1379, %v1377
        %v1420 = vpack.c.b16 %v1382, %v1380
        %v1421 = vpack.c.b16 %v1383, %v1381
        %v1422 = vpack.c.b16 %v1386, %v1384
        %v1423 = vpack.c.b16 %v1387, %v1385
        %v1424 = vpack.c.b16 %v1390, %v1388
        %v1425 = vpack.c.b16 %v1391, %v1389
        %v1426 = vpack.c.b16 %v1394, %v1392
        %v1427 = vpack.c.b16 %v1395, %v1393
        %v1428 = vpack.c.b16 %v1398, %v1396
        %v1429 = vpack.c.b16 %v1399, %v1397
        %v1430 = vpack.c.b16 %v1402, %v1400
        %v1431 = vpack.c.b16 %v1403, %v1401
        %v1432 = vpack.c.b16 %v1406, %v1404
        %v1433 = vpack.c.b16 %v1407, %v1405
        %v1434 = vpack.c.b16 %v1410, %v1408
        %v1435 = vpack.c.b16 %v1411, %v1409
        %v1449 = vsel %vm622, %v1413, 0
        %v1452 = vsel %vm622, %v1415, 0
        %v1455 = vsel %vm622, %v1417, 0
        %v1458 = vsel %vm622, %v1419, 0
        %v1461 = vsel %vm622, %v1421, 0
        %v1464 = vsel %vm622, %v1423, 0
        %v1467 = vsel %vm622, %v1425, 0
        %v1470 = vsel %vm622, %v1427, 0
        %v1473 = vsel %vm622, %v1429, 0
        %v1476 = vsel %vm622, %v1431, 0
        %v1479 = vsel %vm622, %v1433, 0
        %v1482 = vsel %vm622, %v1435, 0
        %1484 = vmatprep.subr.bf16.mxu0 0
        %1485 = vmatpush1.bf16.msra.mxu0 %v334
        %1486 = vmatprep.subr.bf16.mxu0 0
        %1487 = vmatpush1.bf16.msra.mxu0 %v335
        %1488 = vmatprep.subr.bf16.mxu0 0
        %1489 = vmatpush1.bf16.msra.mxu0 %v336
        %1490 = vmatprep.subr.bf16.mxu0 0
        %1491 = vmatpush1.bf16.msra.mxu0 %v337
        %1492 = vmatprep.subr.bf16.mxu0 0
        %1493 = vmatpush1.bf16.msra.mxu0 %v338
        %1494 = vmatprep.subr.bf16.mxu0 0
        %1495 = vmatpush1.bf16.msra.mxu0 %v339
        %1496 = vmatprep.subr.bf16.mxu0 0
        %1497 = vmatpush1.bf16.msra.mxu0 %v340
        %1498 = vmatprep.subr.bf16.mxu0 0
        %1499 = vmatpush1.bf16.msra.mxu0 %v341
        %1500 = vmatprep.subr.bf16.mxu0 0
        %1501 = vmatpush1.bf16.msra.mxu0 %v342
        %1502 = vmatprep.subr.bf16.mxu0 0
        %1503 = vmatpush1.bf16.msra.mxu0 %v343
        %1504 = vmatprep.subr.bf16.mxu0 0
        %1505 = vmatpush1.bf16.msra.mxu0 %v344
        %1506 = vmatprep.subr.bf16.mxu0 0
        %1507 = vmatpush1.bf16.msra.mxu0 %v345
        %1508 = vmatprep.subr.bf16.mxu0 0
        %1509 = vmatpush1.bf16.msra.mxu0 0
        %1510 = vmatprep.subr.bf16.mxu0 0
        %1511 = vmatpush1.bf16.msra.mxu0 0
        %1512 = vmatprep.subr.bf16.mxu0 0
        %1513 = vmatpush1.bf16.msra.mxu0 0
        %1514 = vmatprep.subr.bf16.mxu0 0
        %1515 = vmatpush1.bf16.msra.mxu0 0
        %1516 = vmatprep.mubr.bf16.mxu0 %v1449
        %1517 = vmatmul.mubr.bf16.gmra.mrb[0].mxu0 %v1412
        %v1518 = vpop.f32.mrb[0].mxu0
        %v1519 = vadd.f32 0.0, %v1518
        %v1520 = vpop.f32.mrb[0].mxu0
        %v1521 = vpop.f32.mrb[0].mxu0
        %v1522 = vadd.f32 0.0, %v1521
        %v1523 = vpop.f32.mrb[0].mxu0
        %1524 = vmatprep.mubr.bf16.mxu0 %v1452
        %1525 = vmatmul.mubr.bf16.gmra.mrb[0].mxu0 %v1414
        %v1526 = vpop.f32.mrb[0].mxu0
        %v1527 = vadd.f32 0.0, %v1526
        %v1528 = vpop.f32.mrb[0].mxu0
        %v1529 = vpop.f32.mrb[0].mxu0
        %v1530 = vadd.f32 0.0, %v1529
        %v1531 = vpop.f32.mrb[0].mxu0
        %1532 = vmatprep.mubr.bf16.mxu0 %v1455
        %1533 = vmatmul.mubr.bf16.gmra.mrb[0].mxu0 %v1416
        %v1534 = vpop.f32.mrb[0].mxu0
        %v1535 = vadd.f32 0.0, %v1534
        %v1536 = vpop.f32.mrb[0].mxu0
        %v1537 = vpop.f32.mrb[0].mxu0
        %v1538 = vadd.f32 0.0, %v1537
        %v1539 = vpop.f32.mrb[0].mxu0
        %1540 = vmatprep.mubr.bf16.mxu0 %v1458
        %1541 = vmatmul.mubr.bf16.gmra.mrb[0].mxu0 %v1418
        %v1542 = vpop.f32.mrb[0].mxu0
        %v1543 = vadd.f32 0.0, %v1542
        %v1544 = vpop.f32.mrb[0].mxu0
        %v1545 = vpop.f32.mrb[0].mxu0
        %v1546 = vadd.f32 0.0, %v1545
        %v1547 = vpop.f32.mrb[0].mxu0
        %1548 = vmatprep.mubr.bf16.mxu0 %v1461
        %1549 = vmatmul.mubr.bf16.gmra.mrb[0].mxu0 %v1420
        %v1550 = vpop.f32.mrb[0].mxu0
        %v1551 = vadd.f32 0.0, %v1550
        %v1552 = vpop.f32.mrb[0].mxu0
        %v1553 = vpop.f32.mrb[0].mxu0
        %v1554 = vadd.f32 0.0, %v1553
        %v1555 = vpop.f32.mrb[0].mxu0
        %1556 = vmatprep.mubr.bf16.mxu0 %v1464
        %1557 = vmatmul.mubr.bf16.gmra.mrb[0].mxu0 %v1422
        %v1558 = vpop.f32.mrb[0].mxu0
        %v1559 = vadd.f32 0.0, %v1558
        %v1560 = vpop.f32.mrb[0].mxu0
        %v1561 = vpop.f32.mrb[0].mxu0
        %v1562 = vadd.f32 0.0, %v1561
        %v1563 = vpop.f32.mrb[0].mxu0
        %1564 = vmatprep.mubr.bf16.mxu0 %v1467
        %1565 = vmatmul.mubr.bf16.gmra.mrb[0].mxu0 %v1424
        %v1566 = vpop.f32.mrb[0].mxu0
        %v1567 = vadd.f32 0.0, %v1566
        %v1568 = vpop.f32.mrb[0].mxu0
        %v1569 = vpop.f32.mrb[0].mxu0
        %v1570 = vadd.f32 0.0, %v1569
        %v1571 = vpop.f32.mrb[0].mxu0
        %1572 = vmatprep.mubr.bf16.mxu0 %v1470
        %1573 = vmatmul.mubr.bf16.gmra.mrb[0].mxu0 %v1426
        %v1574 = vpop.f32.mrb[0].mxu0
        %v1575 = vadd.f32 0.0, %v1574
        %v1576 = vpop.f32.mrb[0].mxu0
        %v1577 = vpop.f32.mrb[0].mxu0
        %v1578 = vadd.f32 0.0, %v1577
        %v1579 = vpop.f32.mrb[0].mxu0
        %1580 = vmatprep.mubr.bf16.mxu0 %v1473
        %1581 = vmatmul.mubr.bf16.gmra.mrb[0].mxu0 %v1428
        %v1582 = vpop.f32.mrb[0].mxu0
        %v1583 = vadd.f32 0.0, %v1582
        %v1584 = vpop.f32.mrb[0].mxu0
        %v1585 = vpop.f32.mrb[0].mxu0
        %v1586 = vadd.f32 0.0, %v1585
        %v1587 = vpop.f32.mrb[0].mxu0
        %1588 = vmatprep.mubr.bf16.mxu0 %v1476
        %1589 = vmatmul.mubr.bf16.gmra.mrb[0].mxu0 %v1430
        %v1590 = vpop.f32.mrb[0].mxu0
        %v1591 = vadd.f32 0.0, %v1590
        %v1592 = vpop.f32.mrb[0].mxu0
        %v1593 = vpop.f32.mrb[0].mxu0
        %v1594 = vadd.f32 0.0, %v1593
        %v1595 = vpop.f32.mrb[0].mxu0
        %1596 = vmatprep.mubr.bf16.mxu0 %v1479
        %1597 = vmatmul.mubr.bf16.gmra.mrb[0].mxu0 %v1432
        %v1598 = vpop.f32.mrb[0].mxu0
        %v1599 = vadd.f32 0.0, %v1598
        %v1600 = vpop.f32.mrb[0].mxu0
        %v1601 = vpop.f32.mrb[0].mxu0
        %v1602 = vadd.f32 0.0, %v1601
        %v1603 = vpop.f32.mrb[0].mxu0
        %1604 = vmatprep.mubr.bf16.mxu0 %v1482
        %1605 = vmatmul.mubr.bf16.gmra.mrb[0].mxu0 %v1434
        %v1606 = vpop.f32.mrb[0].mxu0
        %v1607 = vadd.f32 0.0, %v1606
        %v1608 = vpop.f32.mrb[0].mxu0
        %v1609 = vpop.f32.mrb[0].mxu0
        %v1610 = vadd.f32 0.0, %v1609
        %v1611 = vpop.f32.mrb[0].mxu0
        %1612 = vdwg.mxu0
        %s1613 = scalar_lea.vmem %s1, 384
        %v1614 = vld [vmem:[%s1613] sm:$0xff]
        %v1615 = vld [vmem:[%s1613 + $0x8] sm:$0xff]
        %v1616 = vld [vmem:[%s1613 + $0x10] sm:$0xff]
        %v1617 = vld [vmem:[%s1613 + $0x18] sm:$0xff]
        %v1618 = vld [vmem:[%s1613 + $0x20] sm:$0xff]
        %v1619 = vld [vmem:[%s1613 + $0x28] sm:$0xff]
        %v1620 = vld [vmem:[%s1613 + $0x30] sm:$0xff]
        %v1621 = vld [vmem:[%s1613 + $0x38] sm:$0xff]
        %v1622 = vld [vmem:[%s1613 + $0x40] sm:$0xff]
        %v1623 = vld [vmem:[%s1613 + $0x48] sm:$0xff]
        %v1624 = vld [vmem:[%s1613 + $0x50] sm:$0xff]
        %v1625 = vld [vmem:[%s1613 + $0x58] sm:$0xff]
        %v1626 = vld [vmem:[%s1613 + $0x60] sm:$0xff]
        %v1627 = vld [vmem:[%s1613 + $0x68] sm:$0xff]
        %v1628 = vld [vmem:[%s1613 + $0x70] sm:$0xff]
        %v1629 = vld [vmem:[%s1613 + $0x78] sm:$0xff]
        %v1630 = vld [vmem:[%s1613 + $0x80] sm:$0xff]
        %v1631 = vld [vmem:[%s1613 + $0x88] sm:$0xff]
        %v1632 = vld [vmem:[%s1613 + $0x90] sm:$0xff]
        %v1633 = vld [vmem:[%s1613 + $0x98] sm:$0xff]
        %v1634 = vld [vmem:[%s1613 + $0xa0] sm:$0xff]
        %v1635 = vld [vmem:[%s1613 + $0xa8] sm:$0xff]
        %v1636 = vld [vmem:[%s1613 + $0xb0] sm:$0xff]
        %v1637 = vld [vmem:[%s1613 + $0xb8] sm:$0xff]
        %v1638 = vpack.c.bf16 %v1292, %v1291
        %v1639 = vpack.c.bf16 %v1294, %v1293
        %v1640 = vpack.c.bf16 %v1296, %v1295
        %v1641 = vpack.c.bf16 %v1298, %v1297
        %v1642 = vpack.c.bf16 %v1300, %v1299
        %v1643 = vpack.c.bf16 %v1302, %v1301
        %v1644 = vpack.c.bf16 %v1304, %v1303
        %v1645 = vpack.c.bf16 %v1306, %v1305
        %v1646 = vpack.c.bf16 %v1308, %v1307
        %v1647 = vpack.c.bf16 %v1310, %v1309
        %v1648 = vpack.c.bf16 %v1312, %v1311
        %v1649 = vpack.c.bf16 %v1314, %v1313
        %s1650 = scalar_lea.vmem %s2, 384
        %v1651 = vld [vmem:[%s1650] sm:$0xff]
        %v1652 = vld [vmem:[%s1650 + $0x8] sm:$0xff]
        %v1653 = vld [vmem:[%s1650 + $0x10] sm:$0xff]
        %v1654 = vld [vmem:[%s1650 + $0x18] sm:$0xff]
        %v1655 = vld [vmem:[%s1650 + $0x20] sm:$0xff]
        %v1656 = vld [vmem:[%s1650 + $0x28] sm:$0xff]
        %v1657 = vld [vmem:[%s1650 + $0x30] sm:$0xff]
        %v1658 = vld [vmem:[%s1650 + $0x38] sm:$0xff]
        %v1659 = vld [vmem:[%s1650 + $0x40] sm:$0xff]
        %v1660 = vld [vmem:[%s1650 + $0x48] sm:$0xff]
        %v1661 = vld [vmem:[%s1650 + $0x50] sm:$0xff]
        %v1662 = vld [vmem:[%s1650 + $0x58] sm:$0xff]
        %v1663 = vld [vmem:[%s1650 + $0x60] sm:$0xff]
        %v1664 = vld [vmem:[%s1650 + $0x68] sm:$0xff]
        %v1665 = vld [vmem:[%s1650 + $0x70] sm:$0xff]
        %v1666 = vld [vmem:[%s1650 + $0x78] sm:$0xff]
        %v1667 = vld [vmem:[%s1650 + $0x80] sm:$0xff]
        %v1668 = vld [vmem:[%s1650 + $0x88] sm:$0xff]
        %v1669 = vld [vmem:[%s1650 + $0x90] sm:$0xff]
        %v1670 = vld [vmem:[%s1650 + $0x98] sm:$0xff]
        %v1671 = vld [vmem:[%s1650 + $0xa0] sm:$0xff]
        %v1672 = vld [vmem:[%s1650 + $0xa8] sm:$0xff]
        %v1673 = vld [vmem:[%s1650 + $0xb0] sm:$0xff]
        %v1674 = vld [vmem:[%s1650 + $0xb8] sm:$0xff]
        %1676 = vset.pattern.permute.xlu0 0
        %1677 = vperm.xlu0 %1676, %v1651
        %v1678 = vpop.permute.xlu0 %1677
        %1681 = vset.pattern.permute.xlu0 0
        %1682 = vperm.xlu0 %1681, %v1652
        %v1683 = vpop.permute.xlu0 %1682
        %1686 = vset.pattern.permute.xlu0 0
        %1687 = vperm.xlu0 %1686, %v1653
        %v1688 = vpop.permute.xlu0 %1687
        %1691 = vset.pattern.permute.xlu0 0
        %1692 = vperm.xlu0 %1691, %v1654
        %v1693 = vpop.permute.xlu0 %1692
        %1696 = vset.pattern.permute.xlu0 0
        %1697 = vperm.xlu0 %1696, %v1655
        %v1698 = vpop.permute.xlu0 %1697
        %1701 = vset.pattern.permute.xlu0 0
        %1702 = vperm.xlu0 %1701, %v1656
        %v1703 = vpop.permute.xlu0 %1702
        %1706 = vset.pattern.permute.xlu0 0
        %1707 = vperm.xlu0 %1706, %v1657
        %v1708 = vpop.permute.xlu0 %1707
        %1711 = vset.pattern.permute.xlu0 0
        %1712 = vperm.xlu0 %1711, %v1658
        %v1713 = vpop.permute.xlu0 %1712
        %1716 = vset.pattern.permute.xlu0 0
        %1717 = vperm.xlu0 %1716, %v1659
        %v1718 = vpop.permute.xlu0 %1717
        %1721 = vset.pattern.permute.xlu0 0
        %1722 = vperm.xlu0 %1721, %v1660
        %v1723 = vpop.permute.xlu0 %1722
        %1726 = vset.pattern.permute.xlu0 0
        %1727 = vperm.xlu0 %1726, %v1661
        %v1728 = vpop.permute.xlu0 %1727
        %1731 = vset.pattern.permute.xlu0 0
        %1732 = vperm.xlu0 %1731, %v1662
        %v1733 = vpop.permute.xlu0 %1732
        %1736 = vset.pattern.permute.xlu0 0
        %1737 = vperm.xlu0 %1736, %v1663
        %v1738 = vpop.permute.xlu0 %1737
        %1741 = vset.pattern.permute.xlu0 0
        %1742 = vperm.xlu0 %1741, %v1664
        %v1743 = vpop.permute.xlu0 %1742
        %1746 = vset.pattern.permute.xlu0 0
        %1747 = vperm.xlu0 %1746, %v1665
        %v1748 = vpop.permute.xlu0 %1747
        %1751 = vset.pattern.permute.xlu0 0
        %1752 = vperm.xlu0 %1751, %v1666
        %v1753 = vpop.permute.xlu0 %1752
        %1756 = vset.pattern.permute.xlu0 0
        %1757 = vperm.xlu0 %1756, %v1667
        %v1758 = vpop.permute.xlu0 %1757
        %1761 = vset.pattern.permute.xlu0 0
        %1762 = vperm.xlu0 %1761, %v1668
        %v1763 = vpop.permute.xlu0 %1762
        %1766 = vset.pattern.permute.xlu0 0
        %1767 = vperm.xlu0 %1766, %v1669
        %v1768 = vpop.permute.xlu0 %1767
        %1771 = vset.pattern.permute.xlu0 0
        %1772 = vperm.xlu0 %1771, %v1670
        %v1773 = vpop.permute.xlu0 %1772
        %1776 = vset.pattern.permute.xlu0 0
        %1777 = vperm.xlu0 %1776, %v1671
        %v1778 = vpop.permute.xlu0 %1777
        %1781 = vset.pattern.permute.xlu0 0
        %1782 = vperm.xlu0 %1781, %v1672
        %v1783 = vpop.permute.xlu0 %1782
        %1786 = vset.pattern.permute.xlu0 0
        %1787 = vperm.xlu0 %1786, %v1673
        %v1788 = vpop.permute.xlu0 %1787
        %1791 = vset.pattern.permute.xlu0 0
        %1792 = vperm.xlu0 %1791, %v1674
        %v1793 = vpop.permute.xlu0 %1792
        %v1819 = vunpack.c.l.b16 %v1614
        %v1820 = vunpack.c.h.b16 %v1614
        %v1821 = vunpack.c.l.b16 %v1615
        %v1822 = vunpack.c.h.b16 %v1615
        %v1823 = vunpack.c.l.b16 %v1616
        %v1824 = vunpack.c.h.b16 %v1616
        %v1825 = vunpack.c.l.b16 %v1617
        %v1826 = vunpack.c.h.b16 %v1617
        %v1827 = vunpack.c.l.b16 %v1618
        %v1828 = vunpack.c.h.b16 %v1618
        %v1829 = vunpack.c.l.b16 %v1619
        %v1830 = vunpack.c.h.b16 %v1619
        %v1831 = vunpack.c.l.b16 %v1620
        %v1832 = vunpack.c.h.b16 %v1620
        %v1833 = vunpack.c.l.b16 %v1621
        %v1834 = vunpack.c.h.b16 %v1621
        %v1835 = vunpack.c.l.b16 %v1622
        %v1836 = vunpack.c.h.b16 %v1622
        %v1837 = vunpack.c.l.b16 %v1623
        %v1838 = vunpack.c.h.b16 %v1623
        %v1839 = vunpack.c.l.b16 %v1624
        %v1840 = vunpack.c.h.b16 %v1624
        %v1841 = vunpack.c.l.b16 %v1625
        %v1842 = vunpack.c.h.b16 %v1625
        %v1843 = vunpack.c.l.b16 %v1626
        %v1844 = vunpack.c.h.b16 %v1626
        %v1845 = vunpack.c.l.b16 %v1627
        %v1846 = vunpack.c.h.b16 %v1627
        %v1847 = vunpack.c.l.b16 %v1628
        %v1848 = vunpack.c.h.b16 %v1628
        %v1849 = vunpack.c.l.b16 %v1629
        %v1850 = vunpack.c.h.b16 %v1629
        %v1851 = vunpack.c.l.b16 %v1630
        %v1852 = vunpack.c.h.b16 %v1630
        %v1853 = vunpack.c.l.b16 %v1631
        %v1854 = vunpack.c.h.b16 %v1631
        %v1855 = vunpack.c.l.b16 %v1632
        %v1856 = vunpack.c.h.b16 %v1632
        %v1857 = vunpack.c.l.b16 %v1633
        %v1858 = vunpack.c.h.b16 %v1633
        %v1859 = vunpack.c.l.b16 %v1634
        %v1860 = vunpack.c.h.b16 %v1634
        %v1861 = vunpack.c.l.b16 %v1635
        %v1862 = vunpack.c.h.b16 %v1635
        %v1863 = vunpack.c.l.b16 %v1636
        %v1864 = vunpack.c.h.b16 %v1636
        %v1865 = vunpack.c.l.b16 %v1637
        %v1866 = vunpack.c.h.b16 %v1637
        %v1867 = vpack.c.b16 %v1821, %v1819
        %v1868 = vpack.c.b16 %v1822, %v1820
        %v1869 = vpack.c.b16 %v1825, %v1823
        %v1870 = vpack.c.b16 %v1826, %v1824
        %v1871 = vpack.c.b16 %v1829, %v1827
        %v1872 = vpack.c.b16 %v1830, %v1828
        %v1873 = vpack.c.b16 %v1833, %v1831
        %v1874 = vpack.c.b16 %v1834, %v1832
        %v1875 = vpack.c.b16 %v1837, %v1835
        %v1876 = vpack.c.b16 %v1838, %v1836
        %v1877 = vpack.c.b16 %v1841, %v1839
        %v1878 = vpack.c.b16 %v1842, %v1840
        %v1879 = vpack.c.b16 %v1845, %v1843
        %v1880 = vpack.c.b16 %v1846, %v1844
        %v1881 = vpack.c.b16 %v1849, %v1847
        %v1882 = vpack.c.b16 %v1850, %v1848
        %v1883 = vpack.c.b16 %v1853, %v1851
        %v1884 = vpack.c.b16 %v1854, %v1852
        %v1885 = vpack.c.b16 %v1857, %v1855
        %v1886 = vpack.c.b16 %v1858, %v1856
        %v1887 = vpack.c.b16 %v1861, %v1859
        %v1888 = vpack.c.b16 %v1862, %v1860
        %v1889 = vpack.c.b16 %v1865, %v1863
        %v1890 = vpack.c.b16 %v1866, %v1864
        %v1904 = vsel %vm622, %v1868, 0
        %v1907 = vsel %vm622, %v1870, 0
        %v1910 = vsel %vm622, %v1872, 0
        %v1913 = vsel %vm622, %v1874, 0
        %v1916 = vsel %vm622, %v1876, 0
        %v1919 = vsel %vm622, %v1878, 0
        %v1922 = vsel %vm622, %v1880, 0
        %v1925 = vsel %vm622, %v1882, 0
        %v1928 = vsel %vm622, %v1884, 0
        %v1931 = vsel %vm622, %v1886, 0
        %v1934 = vsel %vm622, %v1888, 0
        %v1937 = vsel %vm622, %v1890, 0
        %1939 = vmatprep.subr.bf16.mxu0 0
        %1940 = vmatpush1.bf16.msra.mxu0 %v1638
        %1941 = vmatprep.subr.bf16.mxu0 0
        %1942 = vmatpush1.bf16.msra.mxu0 %v1639
        %1943 = vmatprep.subr.bf16.mxu0 0
        %1944 = vmatpush1.bf16.msra.mxu0 %v1640
        %1945 = vmatprep.subr.bf16.mxu0 0
        %1946 = vmatpush1.bf16.msra.mxu0 %v1641
        %1947 = vmatprep.subr.bf16.mxu0 0
        %1948 = vmatpush1.bf16.msra.mxu0 %v1642
        %1949 = vmatprep.subr.bf16.mxu0 0
        %1950 = vmatpush1.bf16.msra.mxu0 %v1643
        %1951 = vmatprep.subr.bf16.mxu0 0
        %1952 = vmatpush1.bf16.msra.mxu0 %v1644
        %1953 = vmatprep.subr.bf16.mxu0 0
        %1954 = vmatpush1.bf16.msra.mxu0 %v1645
        %1955 = vmatprep.subr.bf16.mxu0 0
        %1956 = vmatpush1.bf16.msra.mxu0 %v1646
        %1957 = vmatprep.subr.bf16.mxu0 0
        %1958 = vmatpush1.bf16.msra.mxu0 %v1647
        %1959 = vmatprep.subr.bf16.mxu0 0
        %1960 = vmatpush1.bf16.msra.mxu0 %v1648
        %1961 = vmatprep.subr.bf16.mxu0 0
        %1962 = vmatpush1.bf16.msra.mxu0 %v1649
        %1963 = vmatprep.subr.bf16.mxu0 0
        %1964 = vmatpush1.bf16.msra.mxu0 0
        %1965 = vmatprep.subr.bf16.mxu0 0
        %1966 = vmatpush1.bf16.msra.mxu0 0
        %1967 = vmatprep.subr.bf16.mxu0 0
        %1968 = vmatpush1.bf16.msra.mxu0 0
        %1969 = vmatprep.subr.bf16.mxu0 0
        %1970 = vmatpush1.bf16.msra.mxu0 0
        %1971 = vmatprep.mubr.bf16.mxu0 %v1904
        %1972 = vmatmul.mubr.bf16.gmra.mrb[0].mxu0 %v1867
        %v1973 = vpop.f32.mrb[0].mxu0
        %v1974 = vadd.f32 %v1678, %v1973
        %v1975 = vpop.f32.mrb[0].mxu0
        %v1976 = vpop.f32.mrb[0].mxu0
        %v1977 = vadd.f32 %v1683, %v1976
        %v1978 = vpop.f32.mrb[0].mxu0
        %1979 = vmatprep.mubr.bf16.mxu0 %v1907
        %1980 = vmatmul.mubr.bf16.gmra.mrb[0].mxu0 %v1869
        %v1981 = vpop.f32.mrb[0].mxu0
        %v1982 = vadd.f32 %v1688, %v1981
        %v1983 = vpop.f32.mrb[0].mxu0
        %v1984 = vpop.f32.mrb[0].mxu0
        %v1985 = vadd.f32 %v1693, %v1984
        %v1986 = vpop.f32.mrb[0].mxu0
        %1987 = vmatprep.mubr.bf16.mxu0 %v1910
        %1988 = vmatmul.mubr.bf16.gmra.mrb[0].mxu0 %v1871
        %v1989 = vpop.f32.mrb[0].mxu0
        %v1990 = vadd.f32 %v1698, %v1989
        %v1991 = vpop.f32.mrb[0].mxu0
        %v1992 = vpop.f32.mrb[0].mxu0
        %v1993 = vadd.f32 %v1703, %v1992
        %v1994 = vpop.f32.mrb[0].mxu0
        %1995 = vmatprep.mubr.bf16.mxu0 %v1913
        %1996 = vmatmul.mubr.bf16.gmra.mrb[0].mxu0 %v1873
        %v1997 = vpop.f32.mrb[0].mxu0
        %v1998 = vadd.f32 %v1708, %v1997
        %v1999 = vpop.f32.mrb[0].mxu0
        %v2000 = vpop.f32.mrb[0].mxu0
        %v2001 = vadd.f32 %v1713, %v2000
        %v2002 = vpop.f32.mrb[0].mxu0
        %2003 = vmatprep.mubr.bf16.mxu0 %v1916
        %2004 = vmatmul.mubr.bf16.gmra.mrb[0].mxu0 %v1875
        %v2005 = vpop.f32.mrb[0].mxu0
        %v2006 = vadd.f32 %v1718, %v2005
        %v2007 = vpop.f32.mrb[0].mxu0
        %v2008 = vpop.f32.mrb[0].mxu0
        %v2009 = vadd.f32 %v1723, %v2008
        %v2010 = vpop.f32.mrb[0].mxu0
        %2011 = vmatprep.mubr.bf16.mxu0 %v1919
        %2012 = vmatmul.mubr.bf16.gmra.mrb[0].mxu0 %v1877
        %v2013 = vpop.f32.mrb[0].mxu0
        %v2014 = vadd.f32 %v1728, %v2013
        %v2015 = vpop.f32.mrb[0].mxu0
        %v2016 = vpop.f32.mrb[0].mxu0
        %v2017 = vadd.f32 %v1733, %v2016
        %v2018 = vpop.f32.mrb[0].mxu0
        %2019 = vmatprep.mubr.bf16.mxu0 %v1922
        %2020 = vmatmul.mubr.bf16.gmra.mrb[0].mxu0 %v1879
        %v2021 = vpop.f32.mrb[0].mxu0
        %v2022 = vadd.f32 %v1738, %v2021
        %v2023 = vpop.f32.mrb[0].mxu0
        %v2024 = vpop.f32.mrb[0].mxu0
        %v2025 = vadd.f32 %v1743, %v2024
        %v2026 = vpop.f32.mrb[0].mxu0
        %2027 = vmatprep.mubr.bf16.mxu0 %v1925
        %2028 = vmatmul.mubr.bf16.gmra.mrb[0].mxu0 %v1881
        %v2029 = vpop.f32.mrb[0].mxu0
        %v2030 = vadd.f32 %v1748, %v2029
        %v2031 = vpop.f32.mrb[0].mxu0
        %v2032 = vpop.f32.mrb[0].mxu0
        %v2033 = vadd.f32 %v1753, %v2032
        %v2034 = vpop.f32.mrb[0].mxu0
        %2035 = vmatprep.mubr.bf16.mxu0 %v1928
        %2036 = vmatmul.mubr.bf16.gmra.mrb[0].mxu0 %v1883
        %v2037 = vpop.f32.mrb[0].mxu0
        %v2038 = vadd.f32 %v1758, %v2037
        %v2039 = vpop.f32.mrb[0].mxu0
        %v2040 = vpop.f32.mrb[0].mxu0
        %v2041 = vadd.f32 %v1763, %v2040
        %v2042 = vpop.f32.mrb[0].mxu0
        %2043 = vmatprep.mubr.bf16.mxu0 %v1931
        %2044 = vmatmul.mubr.bf16.gmra.mrb[0].mxu0 %v1885
        %v2045 = vpop.f32.mrb[0].mxu0
        %v2046 = vadd.f32 %v1768, %v2045
        %v2047 = vpop.f32.mrb[0].mxu0
        %v2048 = vpop.f32.mrb[0].mxu0
        %v2049 = vadd.f32 %v1773, %v2048
        %v2050 = vpop.f32.mrb[0].mxu0
        %2051 = vmatprep.mubr.bf16.mxu0 %v1934
        %2052 = vmatmul.mubr.bf16.gmra.mrb[0].mxu0 %v1887
        %v2053 = vpop.f32.mrb[0].mxu0
        %v2054 = vadd.f32 %v1778, %v2053
        %v2055 = vpop.f32.mrb[0].mxu0
        %v2056 = vpop.f32.mrb[0].mxu0
        %v2057 = vadd.f32 %v1783, %v2056
        %v2058 = vpop.f32.mrb[0].mxu0
        %2059 = vmatprep.mubr.bf16.mxu0 %v1937
        %2060 = vmatmul.mubr.bf16.gmra.mrb[0].mxu0 %v1889
        %v2061 = vpop.f32.mrb[0].mxu0
        %v2062 = vadd.f32 %v1788, %v2061
        %v2063 = vpop.f32.mrb[0].mxu0
        %v2064 = vpop.f32.mrb[0].mxu0
        %v2065 = vadd.f32 %v1793, %v2064
        %v2066 = vpop.f32.mrb[0].mxu0
        %2067 = vdwg.mxu0
        %v2068 = vadd.f32 %v1974, %v1519
        %v2069 = vadd.f32 %v1977, %v1522
        %v2070 = vadd.f32 %v1982, %v1527
        %v2071 = vadd.f32 %v1985, %v1530
        %v2072 = vadd.f32 %v1990, %v1535
        %v2073 = vadd.f32 %v1993, %v1538
        %v2074 = vadd.f32 %v1998, %v1543
        %v2075 = vadd.f32 %v2001, %v1546
        %v2076 = vadd.f32 %v2006, %v1551
        %v2077 = vadd.f32 %v2009, %v1554
        %v2078 = vadd.f32 %v2014, %v1559
        %v2079 = vadd.f32 %v2017, %v1562
        %v2080 = vadd.f32 %v2022, %v1567
        %v2081 = vadd.f32 %v2025, %v1570
        %v2082 = vadd.f32 %v2030, %v1575
        %v2083 = vadd.f32 %v2033, %v1578
        %v2084 = vadd.f32 %v2038, %v1583
        %v2085 = vadd.f32 %v2041, %v1586
        %v2086 = vadd.f32 %v2046, %v1591
        %v2087 = vadd.f32 %v2049, %v1594
        %v2088 = vadd.f32 %v2054, %v1599
        %v2089 = vadd.f32 %v2057, %v1602
        %v2090 = vadd.f32 %v2062, %v1607
        %v2091 = vadd.f32 %v2065, %v1610
        %v2092 = vmax.f32 %v2068, 0.0
        %v2093 = vmax.f32 %v2069, 0.0
        %v2094 = vmax.f32 %v2070, 0.0
        %v2095 = vmax.f32 %v2071, 0.0
        %v2096 = vmax.f32 %v2072, 0.0
        %v2097 = vmax.f32 %v2073, 0.0
        %v2098 = vmax.f32 %v2074, 0.0
        %v2099 = vmax.f32 %v2075, 0.0
        %v2100 = vmax.f32 %v2076, 0.0
        %v2101 = vmax.f32 %v2077, 0.0
        %v2102 = vmax.f32 %v2078, 0.0
        %v2103 = vmax.f32 %v2079, 0.0
        %v2104 = vmax.f32 %v2080, 0.0
        %v2105 = vmax.f32 %v2081, 0.0
        %v2106 = vmax.f32 %v2082, 0.0
        %v2107 = vmax.f32 %v2083, 0.0
        %v2108 = vmax.f32 %v2084, 0.0
        %v2109 = vmax.f32 %v2085, 0.0
        %v2110 = vmax.f32 %v2086, 0.0
        %v2111 = vmax.f32 %v2087, 0.0
        %v2112 = vmax.f32 %v2088, 0.0
        %v2113 = vmax.f32 %v2089, 0.0
        %v2114 = vmax.f32 %v2090, 0.0
        %v2115 = vmax.f32 %v2091, 0.0
        %2116 = vst [vmem:[%s308] sm:$0xff] %v2092
        %2117 = vst [vmem:[%s308 + $0x8] sm:$0xff] %v2093
        %2118 = vst [vmem:[%s308 + $0x10] sm:$0xff] %v2094
        %2119 = vst [vmem:[%s308 + $0x18] sm:$0xff] %v2095
        %2120 = vst [vmem:[%s308 + $0x20] sm:$0xff] %v2096
        %2121 = vst [vmem:[%s308 + $0x28] sm:$0xff] %v2097
        %2122 = vst [vmem:[%s308 + $0x30] sm:$0xff] %v2098
        %2123 = vst [vmem:[%s308 + $0x38] sm:$0xff] %v2099
        %2124 = vst [vmem:[%s308 + $0x40] sm:$0xff] %v2100
        %2125 = vst [vmem:[%s308 + $0x48] sm:$0xff] %v2101
        %2126 = vst [vmem:[%s308 + $0x50] sm:$0xff] %v2102
        %2127 = vst [vmem:[%s308 + $0x58] sm:$0xff] %v2103
        %2128 = vst [vmem:[%s308 + $0x60] sm:$0xff] %v2104
        %2129 = vst [vmem:[%s308 + $0x68] sm:$0xff] %v2105
        %2130 = vst [vmem:[%s308 + $0x70] sm:$0xff] %v2106
        %2131 = vst [vmem:[%s308 + $0x78] sm:$0xff] %v2107
        %2132 = vst [vmem:[%s308 + $0x80] sm:$0xff] %v2108
        %2133 = vst [vmem:[%s308 + $0x88] sm:$0xff] %v2109
        %2134 = vst [vmem:[%s308 + $0x90] sm:$0xff] %v2110
        %2135 = vst [vmem:[%s308 + $0x98] sm:$0xff] %v2111
        %2136 = vst [vmem:[%s308 + $0xa0] sm:$0xff] %v2112
        %2137 = vst [vmem:[%s308 + $0xa8] sm:$0xff] %v2113
        %2138 = vst [vmem:[%s308 + $0xb0] sm:$0xff] %v2114
        %2139 = vst [vmem:[%s308 + $0xb8] sm:$0xff] %v2115
        %s2140 = sand.u32 %s106, 1
        %s2141 = sand.u32 %s106, 1
        %s2142 = smul.addr %s2141, 192
        %s2143 = scalar_lea.vmem [#allocation3], %s2142
        // Predicated region
        $region71: #{_strm_apply.1} parent=65 // pred_check
          %p2144 = pneg %p116
        $region72: #{_strm_apply.1} parent=65 // pred_check_branch
          %2146 = sbr.rel (%p2144) target = $region74
        $region73: #{_strm_apply.1} parent=65 // pred_region
          %s2147 = smul.addr %s18, 48
          %s2148 = sadd.s32 %s19, %s2147
          %s2149 = smul.addr %s2148, 8
          %s2150 = scalar_lea.vmem %s3, %s2149
          // Predicated region
          $region75: #{_strm_apply.1} parent=73 // pred_check
            _
          $region76: #{_strm_apply.1} parent=73 // pred_check_branch
            %2152 = sbr.rel (0) target = $region78
          $region77: #{_strm_apply.1} parent=73 // pred_region
            // Predicated region
            $region79: #{_strm_apply.1} parent=77 // pred_check
              _
            $region80: #{_strm_apply.1} parent=77 // pred_check_branch
              %2154 = sbr.rel (0) target = $region82
            $region81: #{_strm_apply.1} parent=77 // pred_region
              // Predicated region
              $region94: #{_strm_apply.1} parent=81 // pred_check
                _
              $region95: #{_strm_apply.1} parent=81 // pred_check_branch
                %2215 = sbr.rel (0) target = $region97
              $region96: #{_strm_apply.1} parent=81 // pred_region
                loop: start=0, step=1, limit=1
                $region98: #{_strm_apply.1} parent=96 // loop_pre_header
                  _
                $region99: #{_strm_apply.1} parent=96 // loop_header
                  %s2217 = sphi 0, %s2221
                  %p2218 = scmp.ge.s32.totalorder %s2217, 1
                  %s2222 = sphi %s2143, %s2143
                  %s2223 = sphi %s2150, %s2150
                $region100: #{_strm_apply.1} parent=96 // loop_header_branch
                  %2220 = sbr.rel (%p2218) target = $region104
                $region101: #{_strm_apply.1} parent=96 // loop_body
                  %v2224 = vld [vmem:[%s2222] sm:$0xff]
                  %2225 = vst [vmem:[%s2223] sm:$0xff] %v2224
                  %v2226 = vld [vmem:[%s2222 + $0x8] sm:$0xff]
                  %2227 = vst [vmem:[%s2223 + $0x10] sm:$0xff] %v2226
                  %v2228 = vld [vmem:[%s2222 + $0x10] sm:$0xff]
                  %2229 = vst [vmem:[%s2223 + $0x20] sm:$0xff] %v2228
                  %v2230 = vld [vmem:[%s2222 + $0x18] sm:$0xff]
                  %2231 = vst [vmem:[%s2223 + $0x30] sm:$0xff] %v2230
                  %v2232 = vld [vmem:[%s2222 + $0x20] sm:$0xff]
                  %2233 = vst [vmem:[%s2223 + $0x40] sm:$0xff] %v2232
                  %v2234 = vld [vmem:[%s2222 + $0x28] sm:$0xff]
                  %2235 = vst [vmem:[%s2223 + $0x50] sm:$0xff] %v2234
                  %v2236 = vld [vmem:[%s2222 + $0x30] sm:$0xff]
                  %2237 = vst [vmem:[%s2223 + $0x60] sm:$0xff] %v2236
                  %v2238 = vld [vmem:[%s2222 + $0x38] sm:$0xff]
                  %2239 = vst [vmem:[%s2223 + $0x70] sm:$0xff] %v2238
                  %v2240 = vld [vmem:[%s2222 + $0x40] sm:$0xff]
                  %2241 = vst [vmem:[%s2223 + $0x80] sm:$0xff] %v2240
                  %v2242 = vld [vmem:[%s2222 + $0x48] sm:$0xff]
                  %2243 = vst [vmem:[%s2223 + $0x90] sm:$0xff] %v2242
                  %v2244 = vld [vmem:[%s2222 + $0x50] sm:$0xff]
                  %2245 = vst [vmem:[%s2223 + $0xa0] sm:$0xff] %v2244
                  %v2246 = vld [vmem:[%s2222 + $0x58] sm:$0xff]
                  %2247 = vst [vmem:[%s2223 + $0xb0] sm:$0xff] %v2246
                  %v2248 = vld [vmem:[%s2222 + $0x60] sm:$0xff]
                  %2249 = vst [vmem:[%s2223 + $0xc0] sm:$0xff] %v2248
                  %v2250 = vld [vmem:[%s2222 + $0x68] sm:$0xff]
                  %2251 = vst [vmem:[%s2223 + $0xd0] sm:$0xff] %v2250
                  %v2252 = vld [vmem:[%s2222 + $0x70] sm:$0xff]
                  %2253 = vst [vmem:[%s2223 + $0xe0] sm:$0xff] %v2252
                  %v2254 = vld [vmem:[%s2222 + $0x78] sm:$0xff]
                  %2255 = vst [vmem:[%s2223 + $0xf0] sm:$0xff] %v2254
                  %v2256 = vld [vmem:[%s2222 + $0x80] sm:$0xff]
                  %2257 = vst [vmem:[%s2223 + $0x100] sm:$0xff] %v2256
                  %v2258 = vld [vmem:[%s2222 + $0x88] sm:$0xff]
                  %2259 = vst [vmem:[%s2223 + $0x110] sm:$0xff] %v2258
                  %v2260 = vld [vmem:[%s2222 + $0x90] sm:$0xff]
                  %2261 = vst [vmem:[%s2223 + $0x120] sm:$0xff] %v2260
                  %v2262 = vld [vmem:[%s2222 + $0x98] sm:$0xff]
                  %2263 = vst [vmem:[%s2223 + $0x130] sm:$0xff] %v2262
                  %v2264 = vld [vmem:[%s2222 + $0xa0] sm:$0xff]
                  %2265 = vst [vmem:[%s2223 + $0x140] sm:$0xff] %v2264
                  %v2266 = vld [vmem:[%s2222 + $0xa8] sm:$0xff]
                  %2267 = vst [vmem:[%s2223 + $0x150] sm:$0xff] %v2266
                  %v2268 = vld [vmem:[%s2222 + $0xb0] sm:$0xff]
                  %2269 = vst [vmem:[%s2223 + $0x160] sm:$0xff] %v2268
                  %v2270 = vld [vmem:[%s2222 + $0xb8] sm:$0xff]
                  %2271 = vst [vmem:[%s2223 + $0x170] sm:$0xff] %v2270
                $region102: #{_strm_apply.1} parent=96 // loop_footer
                  %s2221 = sadd.s32 1, %s2217
                $region103: #{_strm_apply.1} parent=96 // loop_footer_branch
                  %2216 = sbr.rel target = $region99
                $region104: #{_strm_apply.1} parent=96 // loop_exit
                  _
              $region97: #{_strm_apply.1} parent=81 // pred_fallthru
                _
              // Predicated region
              $region105: #{_strm_apply.1} parent=81 // pred_check
                _
              $region106: #{_strm_apply.1} parent=81 // pred_check_branch
                %2273 = sbr.rel target = $region108
              $region107: #{_strm_apply.1} parent=81 // pred_region
                _
              $region108: #{_strm_apply.1} parent=81 // pred_fallthru
                _
            $region82: #{_strm_apply.1} parent=77 // pred_fallthru
              _
            // Predicated region
            $region83: #{_strm_apply.1} parent=77 // pred_check
              _
            $region84: #{_strm_apply.1} parent=77 // pred_check_branch
              %2156 = sbr.rel target = $region86
            $region85: #{_strm_apply.1} parent=77 // pred_region
              loop: start=0, step=1, limit=1
              $region87: #{_strm_apply.1} parent=85 // loop_pre_header
                _
              $region88: #{_strm_apply.1} parent=85 // loop_header
                %s2159 = sphi 0, %s2163
                %p2160 = scmp.ge.s32.totalorder %s2159, 1
                %s2164 = sphi %s2143, %s2143
                %s2165 = sphi %s2150, %s2150
              $region89: #{_strm_apply.1} parent=85 // loop_header_branch
                %2162 = sbr.rel (%p2160) target = $region93
              $region90: #{_strm_apply.1} parent=85 // loop_body
                %v2166 = vld [vmem:[%s2164] sm:$0xff]
                %2167 = vst [vmem:[%s2165] sm:$0xff] %v2166
                %v2168 = vld [vmem:[%s2164 + $0x8] sm:$0xff]
                %2169 = vst [vmem:[%s2165 + $0x10] sm:$0xff] %v2168
                %v2170 = vld [vmem:[%s2164 + $0x10] sm:$0xff]
                %2171 = vst [vmem:[%s2165 + $0x20] sm:$0xff] %v2170
                %v2172 = vld [vmem:[%s2164 + $0x18] sm:$0xff]
                %2173 = vst [vmem:[%s2165 + $0x30] sm:$0xff] %v2172
                %v2174 = vld [vmem:[%s2164 + $0x20] sm:$0xff]
                %2175 = vst [vmem:[%s2165 + $0x40] sm:$0xff] %v2174
                %v2176 = vld [vmem:[%s2164 + $0x28] sm:$0xff]
                %2177 = vst [vmem:[%s2165 + $0x50] sm:$0xff] %v2176
                %v2178 = vld [vmem:[%s2164 + $0x30] sm:$0xff]
                %2179 = vst [vmem:[%s2165 + $0x60] sm:$0xff] %v2178
                %v2180 = vld [vmem:[%s2164 + $0x38] sm:$0xff]
                %2181 = vst [vmem:[%s2165 + $0x70] sm:$0xff] %v2180
                %v2182 = vld [vmem:[%s2164 + $0x40] sm:$0xff]
                %2183 = vst [vmem:[%s2165 + $0x80] sm:$0xff] %v2182
                %v2184 = vld [vmem:[%s2164 + $0x48] sm:$0xff]
                %2185 = vst [vmem:[%s2165 + $0x90] sm:$0xff] %v2184
                %v2186 = vld [vmem:[%s2164 + $0x50] sm:$0xff]
                %2187 = vst [vmem:[%s2165 + $0xa0] sm:$0xff] %v2186
                %v2188 = vld [vmem:[%s2164 + $0x58] sm:$0xff]
                %2189 = vst [vmem:[%s2165 + $0xb0] sm:$0xff] %v2188
                %v2190 = vld [vmem:[%s2164 + $0x60] sm:$0xff]
                %2191 = vst [vmem:[%s2165 + $0xc0] sm:$0xff] %v2190
                %v2192 = vld [vmem:[%s2164 + $0x68] sm:$0xff]
                %2193 = vst [vmem:[%s2165 + $0xd0] sm:$0xff] %v2192
                %v2194 = vld [vmem:[%s2164 + $0x70] sm:$0xff]
                %2195 = vst [vmem:[%s2165 + $0xe0] sm:$0xff] %v2194
                %v2196 = vld [vmem:[%s2164 + $0x78] sm:$0xff]
                %2197 = vst [vmem:[%s2165 + $0xf0] sm:$0xff] %v2196
                %v2198 = vld [vmem:[%s2164 + $0x80] sm:$0xff]
                %2199 = vst [vmem:[%s2165 + $0x100] sm:$0xff] %v2198
                %v2200 = vld [vmem:[%s2164 + $0x88] sm:$0xff]
                %2201 = vst [vmem:[%s2165 + $0x110] sm:$0xff] %v2200
                %v2202 = vld [vmem:[%s2164 + $0x90] sm:$0xff]
                %2203 = vst [vmem:[%s2165 + $0x120] sm:$0xff] %v2202
                %v2204 = vld [vmem:[%s2164 + $0x98] sm:$0xff]
                %2205 = vst [vmem:[%s2165 + $0x130] sm:$0xff] %v2204
                %v2206 = vld [vmem:[%s2164 + $0xa0] sm:$0xff]
                %2207 = vst [vmem:[%s2165 + $0x140] sm:$0xff] %v2206
                %v2208 = vld [vmem:[%s2164 + $0xa8] sm:$0xff]
                %2209 = vst [vmem:[%s2165 + $0x150] sm:$0xff] %v2208
                %v2210 = vld [vmem:[%s2164 + $0xb0] sm:$0xff]
                %2211 = vst [vmem:[%s2165 + $0x160] sm:$0xff] %v2210
                %v2212 = vld [vmem:[%s2164 + $0xb8] sm:$0xff]
                %2213 = vst [vmem:[%s2165 + $0x170] sm:$0xff] %v2212
              $region91: #{_strm_apply.1} parent=85 // loop_footer
                %s2163 = sadd.s32 1, %s2159
              $region92: #{_strm_apply.1} parent=85 // loop_footer_branch
                %2158 = sbr.rel target = $region88
              $region93: #{_strm_apply.1} parent=85 // loop_exit
                _
            $region86: #{_strm_apply.1} parent=77 // pred_fallthru
              _
          $region78: #{_strm_apply.1} parent=73 // pred_fallthru
            _
          %2274 = vnop
        $region74: #{_strm_apply.1} parent=65 // pred_fallthru
          _
      $region66: #{_strm_apply.1} parent=5 // pred_fallthru
        _
      %p2275 = scmp.le.s32.totalorder 2, %s9
      // Predicated region
      $region109: #{_strm_apply.1} parent=5 // pred_check
        %p2276 = pneg %p2275
      $region110: #{_strm_apply.1} parent=5 // pred_check_branch
        %2278 = sbr.rel (%p2276) target = $region112
      $region111: #{_strm_apply.1} parent=5 // pred_region
        %s2279 = ssub.s32 %s9, 2
        // Predicated region
        $region113: #{_strm_apply.1} parent=111 // pred_check
          %p2280 = pneg %p122
        $region114: #{_strm_apply.1} parent=111 // pred_check_branch
          %2282 = sbr.rel (%p2280) target = $region116
        $region115: #{_strm_apply.1} parent=111 // pred_region
          %s2283 = sand.u32 %s107, 1
          %s2284 = sand.u32 %s107, 1
          %s2285 = smul.addr %s2284, 192
          %s2286 = scalar_lea.vmem [#allocation3], %s2285
        $region116: #{_strm_apply.1} parent=111 // pred_fallthru
          _
      $region112: #{_strm_apply.1} parent=5 // pred_fallthru
        _
    $region6: #{_strm_apply.1} parent=1 // loop_footer
      %s13 = sadd.s32 1, %s9
    $region7: #{_strm_apply.1} parent=1 // loop_footer_branch
      %8 = sbr.rel target = $region3
    $region8: #{_strm_apply.1} parent=1 // loop_exit
      _

</llo_original>
